<compile_context>
chip_gen: v5e
topology: v5e:2x2
jax: 0.10.0
libtpu: 0.0.40
codegen_flags: <defaults>
</compile_context>

<pallas_src>
import jax
import jax.numpy as jnp
from jax import lax
from jax.experimental import pallas as pl
from jax.experimental.pallas import tpu as pltpu

N_NODES = 64          # small synthetic graph
F_IN = 3703           # Citeseer feature dim (hard-coded in the module)
F_HID = 16
F_OUT = 6


def gcn_fused_kernel(a_ref, x_ref, w1t_ref, b1_ref, w2_ref, b2_ref, o_ref):
    # ----- layer 1: X @ W1 on the MXU (bf16 operands, f32 accumulate) -------
    x = x_ref[...].astype(jnp.bfloat16)                  # int8 0/1 -> bf16 (exact)
    # W1 arrives transposed (F_HID, KP); contract x's last dim with w1t's last dim.
    xw1 = lax.dot_general(
        x, w1t_ref[...],
        dimension_numbers=(((1,), (1,)), ((), ())),
        preferred_element_type=jnp.float32)              # [N, F_HID]

    a = a_ref[...].astype(jnp.float32)                   # [N, N], exact 0/1

    h1 = jnp.dot(a, xw1, preferred_element_type=jnp.float32) + b1_ref[...]
    h1 = jnp.maximum(h1, 0.0)

    # note: self.dropout(h1) in the PyTorch forward discards its result -> no-op

    # ----- layer 2: A @ (h1 @ W2) + b2, LogSoftmax(dim=1) -------------------
    hw2 = jnp.dot(h1, w2_ref[...], preferred_element_type=jnp.float32)
    logits = jnp.dot(a, hw2, preferred_element_type=jnp.float32) + b2_ref[...]

    m = jnp.max(logits, axis=-1, keepdims=True)
    z = logits - m
    lse = jnp.log(jnp.sum(jnp.exp(z), axis=-1, keepdims=True))
    o_ref[...] = z - lse                                 # [N, 6]


def gcns_forward(adj, features, w1, b1, w2, b2):
    n, f_in = features.shape
    f_hid = w1.shape[1]
    f_out = w2.shape[1]

    # pad the contraction dim to a multiple of 128 (zeros contribute nothing)
    kp = pl.cdiv(f_in, 128) * 128
    pad = kp - f_in

    # Features are exactly 0/1 -> int8 is exact; halves the largest HBM stream.
    x_i8 = jnp.pad(features, ((0, 0), (0, pad))).astype(jnp.int8)
    # W1 transposed so the big K dim is the lane (last) dim -> lane-dense bf16 DMA.
    w1t = jnp.pad(w1.astype(jnp.float32).T, ((0, 0), (0, pad))).astype(jnp.bfloat16)
    # Adjacency entries are exactly 0/1 -> bf16 is exact and halves its bytes.
    adj_bf = adj.astype(jnp.bfloat16)
    b1 = b1.astype(jnp.float32).reshape(1, f_hid)
    w2 = w2.astype(jnp.float32)
    b2 = b2.astype(jnp.float32).reshape(1, f_out)

    return pl.pallas_call(
        gcn_fused_kernel,
        out_shape=jax.ShapeDtypeStruct((n, f_out), jnp.float32),
        grid=(1,),
        in_specs=[
            pl.BlockSpec((n, n), lambda k: (0, 0)),          # A      (bf16, resident)
            pl.BlockSpec((n, kp), lambda k: (0, 0)),         # X      (int8)
            pl.BlockSpec((f_hid, kp), lambda k: (0, 0)),     # W1^T   (bf16, lane-dense)
            pl.BlockSpec((1, f_hid), lambda k: (0, 0)),      # b1
            pl.BlockSpec((f_hid, f_out), lambda k: (0, 0)),  # W2
            pl.BlockSpec((1, f_out), lambda k: (0, 0)),      # b2
        ],
        out_specs=pl.BlockSpec((n, f_out), lambda k: (0, 0)),
        compiler_params=pltpu.CompilerParams(
            dimension_semantics=("arbitrary",),
        ),
    )(adj_bf, x_i8, w1t, b1, w2, b2)


def gcns_reference(adj, features, w1, b1, w2, b2):
    """Pure-JAX reference (same math, f32 everywhere)."""
    h1 = jnp.maximum(adj @ (features @ w1) + b1, 0.0)
    logits = adj @ (h1 @ w2) + b2
    m = jnp.max(logits, axis=-1, keepdims=True)
    z = logits - m
    return z - jnp.log(jnp.sum(jnp.exp(z), axis=-1, keepdims=True))


def init_params(key):
    k1, k2, k3, k4 = jax.random.split(key, 4)
    # deterministic glorot-ish init (synthetic; no checkpoint loading)
    w1 = jax.random.normal(k1, (F_IN, F_HID), jnp.float32) * (1.0 / jnp.sqrt(F_IN))
    b1 = jax.random.normal(k2, (1, F_HID), jnp.float32) * 0.01
    w2 = jax.random.normal(k3, (F_HID, F_OUT), jnp.float32) * (1.0 / jnp.sqrt(F_HID))
    b2 = jax.random.normal(k4, (1, F_OUT), jnp.float32) * 0.01
    return w1, b1, w2, b2


def make_graph_and_features(key, n_nodes):
    ka, kx = jax.random.split(key)
    # random sparse-ish symmetric adjacency with self-loops (sum-aggregation GCN)
    rnd = jax.random.uniform(ka, (n_nodes, n_nodes))
    adj = (rnd < 0.05).astype(jnp.float32)
    adj = jnp.maximum(adj, adj.T)
    adj = jnp.maximum(adj, jnp.eye(n_nodes, dtype=jnp.float32))
    # binary bag-of-words style features (exactly representable in int8 / bf16)
    feats = (jax.random.uniform(kx, (n_nodes, F_IN)) < 0.02).astype(jnp.float32)
    return adj, feats


if __name__ == "__main__":
    key = jax.random.PRNGKey(0)
    k_graph, k_param = jax.random.split(key)

    adj, feats = make_graph_and_features(k_graph, N_NODES)
    w1, b1, w2, b2 = init_params(k_param)

    out = gcns_forward(adj, feats, w1, b1, w2, b2)
    out = jax.block_until_ready(out)

    assert out.shape == (N_NODES, F_OUT)
    assert out.dtype == jnp.float32
    # sanity: rows of log-softmax should exponentiate-sum to ~1
    assert jnp.allclose(jnp.sum(jnp.exp(out), axis=1), 1.0, atol=1e-4)

    # numerical check vs. pure-JAX reference with the same bf16-rounded W1
    w1_bf = w1.astype(jnp.bfloat16).astype(jnp.float32)
    ref = gcns_reference(adj, feats, w1_bf, b1, w2, b2)
    assert jnp.allclose(out, ref, atol=1e-2, rtol=1e-2)

    print("KERNEL_OK")
</pallas_src>

<mosaic_0001>
module attributes {stable_mosaic.version = 11 : i64} {
  func.func @gcn_fused_kernel(%arg0: i32, %arg1: memref<64x64xbf16, #tpu.memory_space<vmem>>, %arg2: memref<64x3712xi8, #tpu.memory_space<vmem>>, %arg3: memref<16x3712xbf16, #tpu.memory_space<vmem>>, %arg4: memref<1x16xf32, #tpu.memory_space<vmem>>, %arg5: memref<16x6xf32, #tpu.memory_space<vmem>>, %arg6: memref<1x6xf32, #tpu.memory_space<vmem>>, %arg7: memref<64x6xf32, #tpu.memory_space<vmem>>) attributes {dimension_semantics = [#tpu.dimension_semantics<arbitrary>], iteration_bounds = array<i64: 1>, scalar_prefetch = 0 : i64, scratch_operands = 0 : i64, tpu.core_type = #tpu.core_type<tc>, window_params = [{pipeline_mode = #tpu.pipeline_mode<synchronous>, transform_indices = @transform_0, window_bounds = array<i64: 64, 64>}, {pipeline_mode = #tpu.pipeline_mode<synchronous>, transform_indices = @transform_1, window_bounds = array<i64: 64, 3712>}, {pipeline_mode = #tpu.pipeline_mode<synchronous>, transform_indices = @transform_2, window_bounds = array<i64: 16, 3712>}, {pipeline_mode = #tpu.pipeline_mode<synchronous>, transform_indices = @transform_3, window_bounds = array<i64: 1, 16>}, {pipeline_mode = #tpu.pipeline_mode<synchronous>, transform_indices = @transform_4, window_bounds = array<i64: 16, 6>}, {pipeline_mode = #tpu.pipeline_mode<synchronous>, transform_indices = @transform_5, window_bounds = array<i64: 1, 6>}, {pipeline_mode = #tpu.pipeline_mode<synchronous>, transform_indices = @transform_6, window_bounds = array<i64: 64, 6>}]} {
    %c0 = arith.constant 0 : index
    %c0_0 = arith.constant 0 : index
    %0 = vector.load %arg2[%c0, %c0_0] : memref<64x3712xi8, #tpu.memory_space<vmem>>, vector<64x3712xi8>
    %1 = arith.sitofp %0 : vector<64x3712xi8> to vector<64x3712xbf16>
    %c0_1 = arith.constant 0 : index
    %c0_2 = arith.constant 0 : index
    %2 = vector.load %arg3[%c0_1, %c0_2] : memref<16x3712xbf16, #tpu.memory_space<vmem>>, vector<16x3712xbf16>
    %cst = arith.constant dense<0.000000e+00> : vector<64x16xf32>
    %3 = tpu.matmul %1, %2, %cst {dimension_numbers = #tpu.dot_dimension_numbers<[1], [1], [0], [0], [0, 0, 1, 0], [], []>} : vector<64x3712xbf16>, vector<16x3712xbf16>, vector<64x16xf32> -> vector<64x16xf32>
    %c0_3 = arith.constant 0 : index
    %c0_4 = arith.constant 0 : index
    %4 = vector.load %arg1[%c0_3, %c0_4] : memref<64x64xbf16, #tpu.memory_space<vmem>>, vector<64x64xbf16>
    %5 = arith.extf %4 : vector<64x64xbf16> to vector<64x64xf32>
    %cst_5 = arith.constant dense<0.000000e+00> : vector<64x16xf32>
    %6 = tpu.matmul %5, %3, %cst_5 {dimension_numbers = #tpu.dot_dimension_numbers<[1], [0], [0], [1], [0, 0, 1, 1], [], []>} : vector<64x64xf32>, vector<64x16xf32>, vector<64x16xf32> -> vector<64x16xf32>
    %c0_6 = arith.constant 0 : index
    %c0_7 = arith.constant 0 : index
    %7 = vector.load %arg4[%c0_6, %c0_7] : memref<1x16xf32, #tpu.memory_space<vmem>>, vector<1x16xf32>
    %8 = vector.broadcast %7 : vector<1x16xf32> to vector<64x16xf32>
    %9 = arith.addf %6, %8 : vector<64x16xf32>
    %cst_8 = arith.constant 0.000000e+00 : f32
    %10 = vector.broadcast %cst_8 : f32 to vector<64x16xf32>
    %11 = arith.maximumf %9, %10 : vector<64x16xf32>
    %c0_9 = arith.constant 0 : index
    %c0_10 = arith.constant 0 : index
    %12 = vector.load %arg5[%c0_9, %c0_10] : memref<16x6xf32, #tpu.memory_space<vmem>>, vector<16x6xf32>
    %cst_11 = arith.constant dense<0.000000e+00> : vector<64x6xf32>
    %13 = tpu.matmul %11, %12, %cst_11 {dimension_numbers = #tpu.dot_dimension_numbers<[1], [0], [0], [1], [0, 0, 1, 1], [], []>} : vector<64x16xf32>, vector<16x6xf32>, vector<64x6xf32> -> vector<64x6xf32>
    %cst_12 = arith.constant dense<0.000000e+00> : vector<64x6xf32>
    %14 = tpu.matmul %5, %13, %cst_12 {dimension_numbers = #tpu.dot_dimension_numbers<[1], [0], [0], [1], [0, 0, 1, 1], [], []>} : vector<64x64xf32>, vector<64x6xf32>, vector<64x6xf32> -> vector<64x6xf32>
    %c0_13 = arith.constant 0 : index
    %c0_14 = arith.constant 0 : index
    %15 = vector.load %arg6[%c0_13, %c0_14] : memref<1x6xf32, #tpu.memory_space<vmem>>, vector<1x6xf32>
    %16 = vector.broadcast %15 : vector<1x6xf32> to vector<64x6xf32>
    %17 = arith.addf %14, %16 : vector<64x6xf32>
    %cst_15 = arith.constant dense<0xFF800000> : vector<64xf32>
    %18 = vector.multi_reduction <maximumf>, %17, %cst_15 [1] : vector<64x6xf32> to vector<64xf32>
    %19 = vector.shape_cast %18 : vector<64xf32> to vector<64x1xf32>
    %20 = vector.broadcast %19 : vector<64x1xf32> to vector<64x6xf32>
    %21 = arith.subf %17, %20 : vector<64x6xf32>
    %22 = math.exp %21 : vector<64x6xf32>
    %cst_16 = arith.constant dense<0.000000e+00> : vector<64xf32>
    %23 = vector.multi_reduction <add>, %22, %cst_16 [1] : vector<64x6xf32> to vector<64xf32>
    %24 = vector.shape_cast %23 : vector<64xf32> to vector<64x1xf32>
    %25 = math.log %24 : vector<64x1xf32>
    %26 = vector.broadcast %25 : vector<64x1xf32> to vector<64x6xf32>
    %27 = arith.subf %21, %26 : vector<64x6xf32>
    %c0_17 = arith.constant 0 : index
    %c0_18 = arith.constant 0 : index
    %28 = vector.load %arg7[%c0_17, %c0_18] : memref<64x6xf32, #tpu.memory_space<vmem>>, vector<64x6xf32>
    tpu.vector_store %arg7[%c0_17, %c0_18], %27 {strides = array<i32>} : memref<64x6xf32, #tpu.memory_space<vmem>>, vector<64x6xf32>,
    return
  }
  func.func @transform_0(%arg0: i32) -> (i32, i32) {
    %c0_i32 = arith.constant 0 : i32
    %c0_i32_0 = arith.constant 0 : i32
    %c0_i32_1 = arith.constant 0 : i32
    return %c0_i32, %c0_i32_0 : i32, i32
  }
  func.func @transform_1(%arg0: i32) -> (i32, i32) {
    %c0_i32 = arith.constant 0 : i32
    %c0_i32_0 = arith.constant 0 : i32
    %c0_i32_1 = arith.constant 0 : i32
    return %c0_i32, %c0_i32_0 : i32, i32
  }
  func.func @transform_2(%arg0: i32) -> (i32, i32) {
    %c0_i32 = arith.constant 0 : i32
    %c0_i32_0 = arith.constant 0 : i32
    %c0_i32_1 = arith.constant 0 : i32
    return %c0_i32, %c0_i32_0 : i32, i32
  }
  func.func @transform_3(%arg0: i32) -> (i32, i32) {
    %c0_i32 = arith.constant 0 : i32
    %c0_i32_0 = arith.constant 0 : i32
    %c0_i32_1 = arith.constant 0 : i32
    return %c0_i32, %c0_i32_0 : i32, i32
  }
  func.func @transform_4(%arg0: i32) -> (i32, i32) {
    %c0_i32 = arith.constant 0 : i32
    %c0_i32_0 = arith.constant 0 : i32
    %c0_i32_1 = arith.constant 0 : i32
    return %c0_i32, %c0_i32_0 : i32, i32
  }
  func.func @transform_5(%arg0: i32) -> (i32, i32) {
    %c0_i32 = arith.constant 0 : i32
    %c0_i32_0 = arith.constant 0 : i32
    %c0_i32_1 = arith.constant 0 : i32
    return %c0_i32, %c0_i32_0 : i32, i32
  }
  func.func @transform_6(%arg0: i32) -> (i32, i32) {
    %c0_i32 = arith.constant 0 : i32
    %c0_i32_0 = arith.constant 0 : i32
    %c0_i32_1 = arith.constant 0 : i32
    return %c0_i32, %c0_i32_0 : i32, i32
  }
}

</mosaic_0001>

<llo_original>
// kernel: tpu_custom_call.1
$region0: #{tpu_custom_call.1}
  #allocation0 [shape = 'u32[]', space=smem, size = 0x4, offset = 0x4, fixed_abs, tag = 'smem constant byte address 0x4 - core index']
  #allocation1 [shape = 'u32[72,128]{1,0:T(1,128)}', space=vmem, size = 0x9000, scoped, tag = 'internal scratch']
  %s0 = inlined_call_operand.hbm [shape: bf16[64,64], index: 0, kind: input, shape index: {}]
  %s1 = inlined_call_operand.hbm [shape: s8[64,3712], index: 1, kind: input, shape index: {}]
  %s2 = inlined_call_operand.hbm [shape: bf16[16,3712], index: 2, kind: input, shape index: {}]
  %s3 = inlined_call_operand.vmem [shape: f32[1,16], index: 3, kind: input, shape index: {}]
  %s4 = inlined_call_operand.vmem [shape: f32[16,6], index: 4, kind: input, shape index: {}]
  %s5 = inlined_call_operand.vmem [shape: f32[1,6], index: 5, kind: input, shape index: {}]
  %s6 = inlined_call_operand.vmem [shape: f32[64,6], index: 6, kind: output, shape index: {}]
  %s7 = sld [smem:[#allocation0]]
  $region46: #{tpu_custom_call.1} parent=0
    _
  %s9 = ssub.s32 1, %s7
  %s10 = scalar_select 0, %s9, %s7
  $region1: #{tpu_custom_call.1} parent=0
    #allocation2 [shape = 'u8[16384]{0}', space=vmem, size = 0x4000, scoped, tag = 'input window, operand 0, single buffered']
    #allocation3 [shape = 's32[1]{0}', space=sflag, size = 0x4, scoped, tag = 'scoped memory for tpu_custom_call.1']
    #allocation4 [shape = 'u8[237568]{0}', space=vmem, size = 0x3a000, scoped, tag = 'input window, operand 1, single buffered']
    #allocation5 [shape = 's32[1]{0}', space=sflag, size = 0x4, scoped, tag = 'scoped memory for tpu_custom_call.1']
    #allocation6 [shape = 'u8[118784]{0}', space=vmem, size = 0x1d000, scoped, tag = 'input window, operand 2, single buffered']
    %11 = vsyncpa [#allocation3], 0
    %12 = vsyncpa [#allocation5], 0
    // Predicated region
    $region2: #{tpu_custom_call.1} parent=1 // pred_check
      _
    $region3: #{tpu_custom_call.1} parent=1 // pred_check_branch
      %14 = sbr.rel (0) target = $region5
    $region4: #{tpu_custom_call.1} parent=1 // pred_region
      %16 = vsyncadd [#allocation3], 0
      %s17 = sshll.u32 %s0, 4
      %s18 = int_to_ptr.hbm [resolvable:$true] %s17
      %s19 = sshll.u32 [#allocation2], 4
      %s20 = int_to_ptr.vmem [resolvable:$true] %s19
      %25 = dma.hbm_to_vmem [thread:$0]  %s18, 512, %s20, [#allocation3], 64, 64, 4
    $region5: #{tpu_custom_call.1} parent=1 // pred_fallthru
      _
    // Predicated region
    $region6: #{tpu_custom_call.1} parent=1 // pred_check
      _
    $region7: #{tpu_custom_call.1} parent=1 // pred_check_branch
      %27 = sbr.rel (0) target = $region9
    $region8: #{tpu_custom_call.1} parent=1 // pred_region
      %29 = vsyncadd [#allocation5], 0
      %s30 = sshll.u32 %s1, 4
      %s31 = int_to_ptr.hbm [resolvable:$true] %s30
      %s32 = sshll.u32 [#allocation4], 4
      %s33 = int_to_ptr.vmem [resolvable:$true] %s32
      %38 = dma.hbm_to_vmem [thread:$0]  %s31, 7424, %s33, [#allocation5], 3712, 3712, 232
    $region9: #{tpu_custom_call.1} parent=1 // pred_fallthru
      _
    // Predicated region
    $region10: #{tpu_custom_call.1} parent=1 // pred_check
      _
    $region11: #{tpu_custom_call.1} parent=1 // pred_check_branch
      %40 = sbr.rel (0) target = $region13
    $region12: #{tpu_custom_call.1} parent=1 // pred_region
      %42 = vsyncadd [#allocation5], 0
      %s43 = sshll.u32 %s2, 4
      %s44 = int_to_ptr.hbm [resolvable:$true] %s43
      %s45 = sshll.u32 [#allocation6], 4
      %s46 = int_to_ptr.vmem [resolvable:$true] %s45
      %51 = dma.hbm_to_vmem [thread:$0]  %s44, 3712, %s46, [#allocation5], 1856, 1856, 116
    $region13: #{tpu_custom_call.1} parent=1 // pred_fallthru
      _
    // Predicated region
    $region14: #{tpu_custom_call.1} parent=1 // pred_check
      _
    $region15: #{tpu_custom_call.1} parent=1 // pred_check_branch
      %53 = sbr.rel (0) target = $region17
    $region16: #{tpu_custom_call.1} parent=1 // pred_region
      _
    $region17: #{tpu_custom_call.1} parent=1 // pred_fallthru
      _
    // Predicated region
    $region18: #{tpu_custom_call.1} parent=1 // pred_check
      _
    $region19: #{tpu_custom_call.1} parent=1 // pred_check_branch
      %55 = sbr.rel (0) target = $region21
    $region20: #{tpu_custom_call.1} parent=1 // pred_region
      _
    $region21: #{tpu_custom_call.1} parent=1 // pred_fallthru
      _
    // Predicated region
    $region22: #{tpu_custom_call.1} parent=1 // pred_check
      _
    $region23: #{tpu_custom_call.1} parent=1 // pred_check_branch
      %57 = sbr.rel (0) target = $region25
    $region24: #{tpu_custom_call.1} parent=1 // pred_region
      _
    $region25: #{tpu_custom_call.1} parent=1 // pred_fallthru
      _
    // Predicated region
    $region26: #{tpu_custom_call.1} parent=1 // pred_check
      _
    $region27: #{tpu_custom_call.1} parent=1 // pred_check_branch
      %59 = sbr.rel (0) target = $region29
    $region28: #{tpu_custom_call.1} parent=1 // pred_region
      %61 = dma.done [#allocation3], 512
    $region29: #{tpu_custom_call.1} parent=1 // pred_fallthru
      _
    // Predicated region
    $region30: #{tpu_custom_call.1} parent=1 // pred_check
      _
    $region31: #{tpu_custom_call.1} parent=1 // pred_check_branch
      %63 = sbr.rel (0) target = $region33
    $region32: #{tpu_custom_call.1} parent=1 // pred_region
      %65 = dma.done [#allocation5], 7424
    $region33: #{tpu_custom_call.1} parent=1 // pred_fallthru
      _
    // Predicated region
    $region34: #{tpu_custom_call.1} parent=1 // pred_check
      _
    $region35: #{tpu_custom_call.1} parent=1 // pred_check_branch
      %67 = sbr.rel (0) target = $region37
    $region36: #{tpu_custom_call.1} parent=1 // pred_region
      %69 = dma.done [#allocation5], 3712
    $region37: #{tpu_custom_call.1} parent=1 // pred_fallthru
      _
    %v71 = vld [vmem:[#allocation4] sm:$0xff]
    %v72 = vld [vmem:[#allocation4 + $0x8] sm:$0xff]
    %v73 = vld [vmem:[#allocation4 + $0x10] sm:$0xff]
    %v74 = vld [vmem:[#allocation4 + $0x18] sm:$0xff]
    %v75 = vld [vmem:[#allocation4 + $0x20] sm:$0xff]
    %v76 = vld [vmem:[#allocation4 + $0x28] sm:$0xff]
    %v77 = vld [vmem:[#allocation4 + $0x30] sm:$0xff]
    %v78 = vld [vmem:[#allocation4 + $0x38] sm:$0xff]
    %v79 = vld [vmem:[#allocation4 + $0x40] sm:$0xff]
    %v80 = vld [vmem:[#allocation4 + $0x48] sm:$0xff]
    %v81 = vld [vmem:[#allocation4 + $0x50] sm:$0xff]
    %v82 = vld [vmem:[#allocation4 + $0x58] sm:$0xff]
    %v83 = vld [vmem:[#allocation4 + $0x60] sm:$0xff]
    %v84 = vld [vmem:[#allocation4 + $0x68] sm:$0xff]
    %v85 = vld [vmem:[#allocation4 + $0x70] sm:$0xff]
    %v86 = vld [vmem:[#allocation4 + $0x78] sm:$0xff]
    %v87 = vld [vmem:[#allocation4 + $0x80] sm:$0xff]
    %v88 = vld [vmem:[#allocation4 + $0x88] sm:$0xff]
    %v89 = vld [vmem:[#allocation4 + $0x90] sm:$0xff]
    %v90 = vld [vmem:[#allocation4 + $0x98] sm:$0xff]
    %v91 = vld [vmem:[#allocation4 + $0xa0] sm:$0xff]
    %v92 = vld [vmem:[#allocation4 + $0xa8] sm:$0xff]
    %v93 = vld [vmem:[#allocation4 + $0xb0] sm:$0xff]
    %v94 = vld [vmem:[#allocation4 + $0xb8] sm:$0xff]
    %v95 = vld [vmem:[#allocation4 + $0xc0] sm:$0xff]
    %v96 = vld [vmem:[#allocation4 + $0xc8] sm:$0xff]
    %v97 = vld [vmem:[#allocation4 + $0xd0] sm:$0xff]
    %v98 = vld [vmem:[#allocation4 + $0xd8] sm:$0xff]
    %v99 = vld [vmem:[#allocation4 + $0xe0] sm:$0xff]
    %v100 = vld [vmem:[#allocation4 + $0xe8] sm:$0xff]
    %v101 = vld [vmem:[#allocation4 + $0xf0] sm:$0xff]
    %v102 = vld [vmem:[#allocation4 + $0xf8] sm:$0xff]
    %v103 = vld [vmem:[#allocation4 + $0x100] sm:$0xff]
    %v104 = vld [vmem:[#allocation4 + $0x108] sm:$0xff]
    %v105 = vld [vmem:[#allocation4 + $0x110] sm:$0xff]
    %v106 = vld [vmem:[#allocation4 + $0x118] sm:$0xff]
    %v107 = vld [vmem:[#allocation4 + $0x120] sm:$0xff]
    %v108 = vld [vmem:[#allocation4 + $0x128] sm:$0xff]
    %v109 = vld [vmem:[#allocation4 + $0x130] sm:$0xff]
    %v110 = vld [vmem:[#allocation4 + $0x138] sm:$0xff]
    %v111 = vld [vmem:[#allocation4 + $0x140] sm:$0xff]
    %v112 = vld [vmem:[#allocation4 + $0x148] sm:$0xff]
    %v113 = vld [vmem:[#allocation4 + $0x150] sm:$0xff]
    %v114 = vld [vmem:[#allocation4 + $0x158] sm:$0xff]
    %v115 = vld [vmem:[#allocation4 + $0x160] sm:$0xff]
    %v116 = vld [vmem:[#allocation4 + $0x168] sm:$0xff]
    %v117 = vld [vmem:[#allocation4 + $0x170] sm:$0xff]
    %v118 = vld [vmem:[#allocation4 + $0x178] sm:$0xff]
    %v119 = vld [vmem:[#allocation4 + $0x180] sm:$0xff]
    %v120 = vld [vmem:[#allocation4 + $0x188] sm:$0xff]
    %v121 = vld [vmem:[#allocation4 + $0x190] sm:$0xff]
    %v122 = vld [vmem:[#allocation4 + $0x198] sm:$0xff]
    %v123 = vld [vmem:[#allocation4 + $0x1a0] sm:$0xff]
    %v124 = vld [vmem:[#allocation4 + $0x1a8] sm:$0xff]
    %v125 = vld [vmem:[#allocation4 + $0x1b0] sm:$0xff]
    %v126 = vld [vmem:[#allocation4 + $0x1b8] sm:$0xff]
    %v127 = vld [vmem:[#allocation4 + $0x1c0] sm:$0xff]
    %v128 = vld [vmem:[#allocation4 + $0x1c8] sm:$0xff]
    %v129 = vunpack.c.0.s8 %v71
    %v130 = vunpack.c.0.s8 %v72
    %v131 = vunpack.c.0.s8 %v73
    %v132 = vunpack.c.0.s8 %v74
    %v133 = vunpack.c.0.s8 %v75
    %v134 = vunpack.c.0.s8 %v76
    %v135 = vunpack.c.0.s8 %v77
    %v136 = vunpack.c.0.s8 %v78
    %v137 = vunpack.c.0.s8 %v79
    %v138 = vunpack.c.0.s8 %v80
    %v139 = vunpack.c.0.s8 %v81
    %v140 = vunpack.c.0.s8 %v82
    %v141 = vunpack.c.0.s8 %v83
    %v142 = vunpack.c.0.s8 %v84
    %v143 = vunpack.c.0.s8 %v85
    %v144 = vunpack.c.0.s8 %v86
    %v145 = vunpack.c.0.s8 %v87
    %v146 = vunpack.c.0.s8 %v88
    %v147 = vunpack.c.0.s8 %v89
    %v148 = vunpack.c.0.s8 %v90
    %v149 = vunpack.c.0.s8 %v91
    %v150 = vunpack.c.0.s8 %v92
    %v151 = vunpack.c.0.s8 %v93
    %v152 = vunpack.c.0.s8 %v94
    %v153 = vunpack.c.0.s8 %v95
    %v154 = vunpack.c.0.s8 %v96
    %v155 = vunpack.c.0.s8 %v97
    %v156 = vunpack.c.0.s8 %v98
    %v157 = vunpack.c.0.s8 %v99
    %v158 = vunpack.c.1.s8 %v71
    %v159 = vunpack.c.1.s8 %v72
    %v160 = vunpack.c.1.s8 %v73
    %v161 = vunpack.c.1.s8 %v74
    %v162 = vunpack.c.1.s8 %v75
    %v163 = vunpack.c.1.s8 %v76
    %v164 = vunpack.c.1.s8 %v77
    %v165 = vunpack.c.1.s8 %v78
    %v166 = vunpack.c.1.s8 %v79
    %v167 = vunpack.c.1.s8 %v80
    %v168 = vunpack.c.1.s8 %v81
    %v169 = vunpack.c.1.s8 %v82
    %v170 = vunpack.c.1.s8 %v83
    %v171 = vunpack.c.1.s8 %v84
    %v172 = vunpack.c.1.s8 %v85
    %v173 = vunpack.c.1.s8 %v86
    %v174 = vunpack.c.1.s8 %v87
    %v175 = vunpack.c.1.s8 %v88
    %v176 = vunpack.c.1.s8 %v89
    %v177 = vunpack.c.1.s8 %v90
    %v178 = vunpack.c.1.s8 %v91
    %v179 = vunpack.c.1.s8 %v92
    %v180 = vunpack.c.1.s8 %v93
    %v181 = vunpack.c.1.s8 %v94
    %v182 = vunpack.c.1.s8 %v95
    %v183 = vunpack.c.1.s8 %v96
    %v184 = vunpack.c.1.s8 %v97
    %v185 = vunpack.c.1.s8 %v98
    %v186 = vunpack.c.1.s8 %v99
    %v187 = vunpack.c.2.s8 %v71
    %v188 = vunpack.c.2.s8 %v72
    %v189 = vunpack.c.2.s8 %v73
    %v190 = vunpack.c.2.s8 %v74
    %v191 = vunpack.c.2.s8 %v75
    %v192 = vunpack.c.2.s8 %v76
    %v193 = vunpack.c.2.s8 %v77
    %v194 = vunpack.c.2.s8 %v78
    %v195 = vunpack.c.2.s8 %v79
    %v196 = vunpack.c.2.s8 %v80
    %v197 = vunpack.c.2.s8 %v81
    %v198 = vunpack.c.2.s8 %v82
    %v199 = vunpack.c.2.s8 %v83
    %v200 = vunpack.c.2.s8 %v84
    %v201 = vunpack.c.2.s8 %v85
    %v202 = vunpack.c.2.s8 %v86
    %v203 = vunpack.c.2.s8 %v87
    %v204 = vunpack.c.2.s8 %v88
    %v205 = vunpack.c.2.s8 %v89
    %v206 = vunpack.c.2.s8 %v90
    %v207 = vunpack.c.2.s8 %v91
    %v208 = vunpack.c.2.s8 %v92
    %v209 = vunpack.c.2.s8 %v93
    %v210 = vunpack.c.2.s8 %v94
    %v211 = vunpack.c.2.s8 %v95
    %v212 = vunpack.c.2.s8 %v96
    %v213 = vunpack.c.2.s8 %v97
    %v214 = vunpack.c.2.s8 %v98
    %v215 = vunpack.c.2.s8 %v99
    %v216 = vunpack.c.3.s8 %v71
    %v217 = vunpack.c.3.s8 %v72
    %v218 = vunpack.c.3.s8 %v73
    %v219 = vunpack.c.3.s8 %v74
    %v220 = vunpack.c.3.s8 %v75
    %v221 = vunpack.c.3.s8 %v76
    %v222 = vunpack.c.3.s8 %v77
    %v223 = vunpack.c.3.s8 %v78
    %v224 = vunpack.c.3.s8 %v79
    %v225 = vunpack.c.3.s8 %v80
    %v226 = vunpack.c.3.s8 %v81
    %v227 = vunpack.c.3.s8 %v82
    %v228 = vunpack.c.3.s8 %v83
    %v229 = vunpack.c.3.s8 %v84
    %v230 = vunpack.c.3.s8 %v85
    %v231 = vunpack.c.3.s8 %v86
    %v232 = vunpack.c.3.s8 %v87
    %v233 = vunpack.c.3.s8 %v88
    %v234 = vunpack.c.3.s8 %v89
    %v235 = vunpack.c.3.s8 %v90
    %v236 = vunpack.c.3.s8 %v91
    %v237 = vunpack.c.3.s8 %v92
    %v238 = vunpack.c.3.s8 %v93
    %v239 = vunpack.c.3.s8 %v94
    %v240 = vunpack.c.3.s8 %v95
    %v241 = vunpack.c.3.s8 %v96
    %v242 = vunpack.c.3.s8 %v97
    %v243 = vunpack.c.3.s8 %v98
    %v244 = vunpack.c.3.s8 %v99
    %v245 = vunpack.c.0.s8 %v100
    %v246 = vunpack.c.0.s8 %v101
    %v247 = vunpack.c.0.s8 %v102
    %v248 = vunpack.c.0.s8 %v103
    %v249 = vunpack.c.0.s8 %v104
    %v250 = vunpack.c.0.s8 %v105
    %v251 = vunpack.c.0.s8 %v106
    %v252 = vunpack.c.0.s8 %v107
    %v253 = vunpack.c.0.s8 %v108
    %v254 = vunpack.c.0.s8 %v109
    %v255 = vunpack.c.0.s8 %v110
    %v256 = vunpack.c.0.s8 %v111
    %v257 = vunpack.c.0.s8 %v112
    %v258 = vunpack.c.0.s8 %v113
    %v259 = vunpack.c.0.s8 %v114
    %v260 = vunpack.c.0.s8 %v115
    %v261 = vunpack.c.0.s8 %v116
    %v262 = vunpack.c.0.s8 %v117
    %v263 = vunpack.c.0.s8 %v118
    %v264 = vunpack.c.0.s8 %v119
    %v265 = vunpack.c.0.s8 %v120
    %v266 = vunpack.c.0.s8 %v121
    %v267 = vunpack.c.0.s8 %v122
    %v268 = vunpack.c.0.s8 %v123
    %v269 = vunpack.c.0.s8 %v124
    %v270 = vunpack.c.0.s8 %v125
    %v271 = vunpack.c.0.s8 %v126
    %v272 = vunpack.c.0.s8 %v127
    %v273 = vunpack.c.0.s8 %v128
    %v274 = vunpack.c.1.s8 %v100
    %v275 = vunpack.c.1.s8 %v101
    %v276 = vunpack.c.1.s8 %v102
    %v277 = vunpack.c.1.s8 %v103
    %v278 = vunpack.c.1.s8 %v104
    %v279 = vunpack.c.1.s8 %v105
    %v280 = vunpack.c.1.s8 %v106
    %v281 = vunpack.c.1.s8 %v107
    %v282 = vunpack.c.1.s8 %v108
    %v283 = vunpack.c.1.s8 %v109
    %v284 = vunpack.c.1.s8 %v110
    %v285 = vunpack.c.1.s8 %v111
    %v286 = vunpack.c.1.s8 %v112
    %v287 = vunpack.c.1.s8 %v113
    %v288 = vunpack.c.1.s8 %v114
    %v289 = vunpack.c.1.s8 %v115
    %v290 = vunpack.c.1.s8 %v116
    %v291 = vunpack.c.1.s8 %v117
    %v292 = vunpack.c.1.s8 %v118
    %v293 = vunpack.c.1.s8 %v119
    %v294 = vunpack.c.1.s8 %v120
    %v295 = vunpack.c.1.s8 %v121
    %v296 = vunpack.c.1.s8 %v122
    %v297 = vunpack.c.1.s8 %v123
    %v298 = vunpack.c.1.s8 %v124
    %v299 = vunpack.c.1.s8 %v125
    %v300 = vunpack.c.1.s8 %v126
    %v301 = vunpack.c.1.s8 %v127
    %v302 = vunpack.c.1.s8 %v128
    %v303 = vunpack.c.2.s8 %v100
    %v304 = vunpack.c.2.s8 %v101
    %v305 = vunpack.c.2.s8 %v102
    %v306 = vunpack.c.2.s8 %v103
    %v307 = vunpack.c.2.s8 %v104
    %v308 = vunpack.c.2.s8 %v105
    %v309 = vunpack.c.2.s8 %v106
    %v310 = vunpack.c.2.s8 %v107
    %v311 = vunpack.c.2.s8 %v108
    %v312 = vunpack.c.2.s8 %v109
    %v313 = vunpack.c.2.s8 %v110
    %v314 = vunpack.c.2.s8 %v111
    %v315 = vunpack.c.2.s8 %v112
    %v316 = vunpack.c.2.s8 %v113
    %v317 = vunpack.c.2.s8 %v114
    %v318 = vunpack.c.2.s8 %v115
    %v319 = vunpack.c.2.s8 %v116
    %v320 = vunpack.c.2.s8 %v117
    %v321 = vunpack.c.2.s8 %v118
    %v322 = vunpack.c.2.s8 %v119
    %v323 = vunpack.c.2.s8 %v120
    %v324 = vunpack.c.2.s8 %v121
    %v325 = vunpack.c.2.s8 %v122
    %v326 = vunpack.c.2.s8 %v123
    %v327 = vunpack.c.2.s8 %v124
    %v328 = vunpack.c.2.s8 %v125
    %v329 = vunpack.c.2.s8 %v126
    %v330 = vunpack.c.2.s8 %v127
    %v331 = vunpack.c.2.s8 %v128
    %v332 = vunpack.c.3.s8 %v100
    %v333 = vunpack.c.3.s8 %v101
    %v334 = vunpack.c.3.s8 %v102
    %v335 = vunpack.c.3.s8 %v103
    %v336 = vunpack.c.3.s8 %v104
    %v337 = vunpack.c.3.s8 %v105
    %v338 = vunpack.c.3.s8 %v106
    %v339 = vunpack.c.3.s8 %v107
    %v340 = vunpack.c.3.s8 %v108
    %v341 = vunpack.c.3.s8 %v109
    %v342 = vunpack.c.3.s8 %v110
    %v343 = vunpack.c.3.s8 %v111
    %v344 = vunpack.c.3.s8 %v112
    %v345 = vunpack.c.3.s8 %v113
    %v346 = vunpack.c.3.s8 %v114
    %v347 = vunpack.c.3.s8 %v115
    %v348 = vunpack.c.3.s8 %v116
    %v349 = vunpack.c.3.s8 %v117
    %v350 = vunpack.c.3.s8 %v118
    %v351 = vunpack.c.3.s8 %v119
    %v352 = vunpack.c.3.s8 %v120
    %v353 = vunpack.c.3.s8 %v121
    %v354 = vunpack.c.3.s8 %v122
    %v355 = vunpack.c.3.s8 %v123
    %v356 = vunpack.c.3.s8 %v124
    %v357 = vunpack.c.3.s8 %v125
    %v358 = vunpack.c.3.s8 %v126
    %v359 = vunpack.c.3.s8 %v127
    %v360 = vunpack.c.3.s8 %v128
    %v361 = vcvt.s32.f32 %v129
    %v362 = vcvt.s32.f32 %v130
    %v363 = vcvt.s32.f32 %v131
    %v364 = vcvt.s32.f32 %v132
    %v365 = vcvt.s32.f32 %v133
    %v366 = vcvt.s32.f32 %v134
    %v367 = vcvt.s32.f32 %v135
    %v368 = vcvt.s32.f32 %v136
    %v369 = vcvt.s32.f32 %v137
    %v370 = vcvt.s32.f32 %v138
    %v371 = vcvt.s32.f32 %v139
    %v372 = vcvt.s32.f32 %v140
    %v373 = vcvt.s32.f32 %v141
    %v374 = vcvt.s32.f32 %v142
    %v375 = vcvt.s32.f32 %v143
    %v376 = vcvt.s32.f32 %v144
    %v377 = vcvt.s32.f32 %v145
    %v378 = vcvt.s32.f32 %v146
    %v379 = vcvt.s32.f32 %v147
    %v380 = vcvt.s32.f32 %v148
    %v381 = vcvt.s32.f32 %v149
    %v382 = vcvt.s32.f32 %v150
    %v383 = vcvt.s32.f32 %v151
    %v384 = vcvt.s32.f32 %v152
    %v385 = vcvt.s32.f32 %v153
    %v386 = vcvt.s32.f32 %v154
    %v387 = vcvt.s32.f32 %v155
    %v388 = vcvt.s32.f32 %v156
    %v389 = vcvt.s32.f32 %v157
    %v390 = vcvt.s32.f32 %v158
    %v391 = vcvt.s32.f32 %v159
    %v392 = vcvt.s32.f32 %v160
    %v393 = vcvt.s32.f32 %v161
    %v394 = vcvt.s32.f32 %v162
    %v395 = vcvt.s32.f32 %v163
    %v396 = vcvt.s32.f32 %v164
    %v397 = vcvt.s32.f32 %v165
    %v398 = vcvt.s32.f32 %v166
    %v399 = vcvt.s32.f32 %v167
    %v400 = vcvt.s32.f32 %v168
    %v401 = vcvt.s32.f32 %v169
    %v402 = vcvt.s32.f32 %v170
    %v403 = vcvt.s32.f32 %v171
    %v404 = vcvt.s32.f32 %v172
    %v405 = vcvt.s32.f32 %v173
    %v406 = vcvt.s32.f32 %v174
    %v407 = vcvt.s32.f32 %v175
    %v408 = vcvt.s32.f32 %v176
    %v409 = vcvt.s32.f32 %v177
    %v410 = vcvt.s32.f32 %v178
    %v411 = vcvt.s32.f32 %v179
    %v412 = vcvt.s32.f32 %v180
    %v413 = vcvt.s32.f32 %v181
    %v414 = vcvt.s32.f32 %v182
    %v415 = vcvt.s32.f32 %v183
    %v416 = vcvt.s32.f32 %v184
    %v417 = vcvt.s32.f32 %v185
    %v418 = vcvt.s32.f32 %v186
    %v419 = vcvt.s32.f32 %v187
    %v420 = vcvt.s32.f32 %v188
    %v421 = vcvt.s32.f32 %v189
    %v422 = vcvt.s32.f32 %v190
    %v423 = vcvt.s32.f32 %v191
    %v424 = vcvt.s32.f32 %v192
    %v425 = vcvt.s32.f32 %v193
    %v426 = vcvt.s32.f32 %v194
    %v427 = vcvt.s32.f32 %v195
    %v428 = vcvt.s32.f32 %v196
    %v429 = vcvt.s32.f32 %v197
    %v430 = vcvt.s32.f32 %v198
    %v431 = vcvt.s32.f32 %v199
    %v432 = vcvt.s32.f32 %v200
    %v433 = vcvt.s32.f32 %v201
    %v434 = vcvt.s32.f32 %v202
    %v435 = vcvt.s32.f32 %v203
    %v436 = vcvt.s32.f32 %v204
    %v437 = vcvt.s32.f32 %v205
    %v438 = vcvt.s32.f32 %v206
    %v439 = vcvt.s32.f32 %v207
    %v440 = vcvt.s32.f32 %v208
    %v441 = vcvt.s32.f32 %v209
    %v442 = vcvt.s32.f32 %v210
    %v443 = vcvt.s32.f32 %v211
    %v444 = vcvt.s32.f32 %v212
    %v445 = vcvt.s32.f32 %v213
    %v446 = vcvt.s32.f32 %v214
    %v447 = vcvt.s32.f32 %v215
    %v448 = vcvt.s32.f32 %v216
    %v449 = vcvt.s32.f32 %v217
    %v450 = vcvt.s32.f32 %v218
    %v451 = vcvt.s32.f32 %v219
    %v452 = vcvt.s32.f32 %v220
    %v453 = vcvt.s32.f32 %v221
    %v454 = vcvt.s32.f32 %v222
    %v455 = vcvt.s32.f32 %v223
    %v456 = vcvt.s32.f32 %v224
    %v457 = vcvt.s32.f32 %v225
    %v458 = vcvt.s32.f32 %v226
    %v459 = vcvt.s32.f32 %v227
    %v460 = vcvt.s32.f32 %v228
    %v461 = vcvt.s32.f32 %v229
    %v462 = vcvt.s32.f32 %v230
    %v463 = vcvt.s32.f32 %v231
    %v464 = vcvt.s32.f32 %v232
    %v465 = vcvt.s32.f32 %v233
    %v466 = vcvt.s32.f32 %v234
    %v467 = vcvt.s32.f32 %v235
    %v468 = vcvt.s32.f32 %v236
    %v469 = vcvt.s32.f32 %v237
    %v470 = vcvt.s32.f32 %v238
    %v471 = vcvt.s32.f32 %v239
    %v472 = vcvt.s32.f32 %v240
    %v473 = vcvt.s32.f32 %v241
    %v474 = vcvt.s32.f32 %v242
    %v475 = vcvt.s32.f32 %v243
    %v476 = vcvt.s32.f32 %v244
    %v477 = vcvt.s32.f32 %v245
    %v478 = vcvt.s32.f32 %v246
    %v479 = vcvt.s32.f32 %v247
    %v480 = vcvt.s32.f32 %v248
    %v481 = vcvt.s32.f32 %v249
    %v482 = vcvt.s32.f32 %v250
    %v483 = vcvt.s32.f32 %v251
    %v484 = vcvt.s32.f32 %v252
    %v485 = vcvt.s32.f32 %v253
    %v486 = vcvt.s32.f32 %v254
    %v487 = vcvt.s32.f32 %v255
    %v488 = vcvt.s32.f32 %v256
    %v489 = vcvt.s32.f32 %v257
    %v490 = vcvt.s32.f32 %v258
    %v491 = vcvt.s32.f32 %v259
    %v492 = vcvt.s32.f32 %v260
    %v493 = vcvt.s32.f32 %v261
    %v494 = vcvt.s32.f32 %v262
    %v495 = vcvt.s32.f32 %v263
    %v496 = vcvt.s32.f32 %v264
    %v497 = vcvt.s32.f32 %v265
    %v498 = vcvt.s32.f32 %v266
    %v499 = vcvt.s32.f32 %v267
    %v500 = vcvt.s32.f32 %v268
    %v501 = vcvt.s32.f32 %v269
    %v502 = vcvt.s32.f32 %v270
    %v503 = vcvt.s32.f32 %v271
    %v504 = vcvt.s32.f32 %v272
    %v505 = vcvt.s32.f32 %v273
    %v506 = vcvt.s32.f32 %v274
    %v507 = vcvt.s32.f32 %v275
    %v508 = vcvt.s32.f32 %v276
    %v509 = vcvt.s32.f32 %v277
    %v510 = vcvt.s32.f32 %v278
    %v511 = vcvt.s32.f32 %v279
    %v512 = vcvt.s32.f32 %v280
    %v513 = vcvt.s32.f32 %v281
    %v514 = vcvt.s32.f32 %v282
    %v515 = vcvt.s32.f32 %v283
    %v516 = vcvt.s32.f32 %v284
    %v517 = vcvt.s32.f32 %v285
    %v518 = vcvt.s32.f32 %v286
    %v519 = vcvt.s32.f32 %v287
    %v520 = vcvt.s32.f32 %v288
    %v521 = vcvt.s32.f32 %v289
    %v522 = vcvt.s32.f32 %v290
    %v523 = vcvt.s32.f32 %v291
    %v524 = vcvt.s32.f32 %v292
    %v525 = vcvt.s32.f32 %v293
    %v526 = vcvt.s32.f32 %v294
    %v527 = vcvt.s32.f32 %v295
    %v528 = vcvt.s32.f32 %v296
    %v529 = vcvt.s32.f32 %v297
    %v530 = vcvt.s32.f32 %v298
    %v531 = vcvt.s32.f32 %v299
    %v532 = vcvt.s32.f32 %v300
    %v533 = vcvt.s32.f32 %v301
    %v534 = vcvt.s32.f32 %v302
    %v535 = vcvt.s32.f32 %v303
    %v536 = vcvt.s32.f32 %v304
    %v537 = vcvt.s32.f32 %v305
    %v538 = vcvt.s32.f32 %v306
    %v539 = vcvt.s32.f32 %v307
    %v540 = vcvt.s32.f32 %v308
    %v541 = vcvt.s32.f32 %v309
    %v542 = vcvt.s32.f32 %v310
    %v543 = vcvt.s32.f32 %v311
    %v544 = vcvt.s32.f32 %v312
    %v545 = vcvt.s32.f32 %v313
    %v546 = vcvt.s32.f32 %v314
    %v547 = vcvt.s32.f32 %v315
    %v548 = vcvt.s32.f32 %v316
    %v549 = vcvt.s32.f32 %v317
    %v550 = vcvt.s32.f32 %v318
    %v551 = vcvt.s32.f32 %v319
    %v552 = vcvt.s32.f32 %v320
    %v553 = vcvt.s32.f32 %v321
    %v554 = vcvt.s32.f32 %v322
    %v555 = vcvt.s32.f32 %v323
    %v556 = vcvt.s32.f32 %v324
    %v557 = vcvt.s32.f32 %v325
    %v558 = vcvt.s32.f32 %v326
    %v559 = vcvt.s32.f32 %v327
    %v560 = vcvt.s32.f32 %v328
    %v561 = vcvt.s32.f32 %v329
    %v562 = vcvt.s32.f32 %v330
    %v563 = vcvt.s32.f32 %v331
    %v564 = vcvt.s32.f32 %v332
    %v565 = vcvt.s32.f32 %v333
    %v566 = vcvt.s32.f32 %v334
    %v567 = vcvt.s32.f32 %v335
    %v568 = vcvt.s32.f32 %v336
    %v569 = vcvt.s32.f32 %v337
    %v570 = vcvt.s32.f32 %v338
    %v571 = vcvt.s32.f32 %v339
    %v572 = vcvt.s32.f32 %v340
    %v573 = vcvt.s32.f32 %v341
    %v574 = vcvt.s32.f32 %v342
    %v575 = vcvt.s32.f32 %v343
    %v576 = vcvt.s32.f32 %v344
    %v577 = vcvt.s32.f32 %v345
    %v578 = vcvt.s32.f32 %v346
    %v579 = vcvt.s32.f32 %v347
    %v580 = vcvt.s32.f32 %v348
    %v581 = vcvt.s32.f32 %v349
    %v582 = vcvt.s32.f32 %v350
    %v583 = vcvt.s32.f32 %v351
    %v584 = vcvt.s32.f32 %v352
    %v585 = vcvt.s32.f32 %v353
    %v586 = vcvt.s32.f32 %v354
    %v587 = vcvt.s32.f32 %v355
    %v588 = vcvt.s32.f32 %v356
    %v589 = vcvt.s32.f32 %v357
    %v590 = vcvt.s32.f32 %v358
    %v591 = vcvt.s32.f32 %v359
    %v592 = vcvt.s32.f32 %v360
    %v593 = vpack.c.bf16 %v390, %v361
    %v594 = vpack.c.bf16 %v391, %v362
    %v595 = vpack.c.bf16 %v392, %v363
    %v596 = vpack.c.bf16 %v393, %v364
    %v597 = vpack.c.bf16 %v394, %v365
    %v598 = vpack.c.bf16 %v395, %v366
    %v599 = vpack.c.bf16 %v396, %v367
    %v600 = vpack.c.bf16 %v397, %v368
    %v601 = vpack.c.bf16 %v398, %v369
    %v602 = vpack.c.bf16 %v399, %v370
    %v603 = vpack.c.bf16 %v400, %v371
    %v604 = vpack.c.bf16 %v401, %v372
    %v605 = vpack.c.bf16 %v402, %v373
    %v606 = vpack.c.bf16 %v403, %v374
    %v607 = vpack.c.bf16 %v404, %v375
    %v608 = vpack.c.bf16 %v405, %v376
    %v609 = vpack.c.bf16 %v406, %v377
    %v610 = vpack.c.bf16 %v407, %v378
    %v611 = vpack.c.bf16 %v408, %v379
    %v612 = vpack.c.bf16 %v409, %v380
    %v613 = vpack.c.bf16 %v410, %v381
    %v614 = vpack.c.bf16 %v411, %v382
    %v615 = vpack.c.bf16 %v412, %v383
    %v616 = vpack.c.bf16 %v413, %v384
    %v617 = vpack.c.bf16 %v414, %v385
    %v618 = vpack.c.bf16 %v415, %v386
    %v619 = vpack.c.bf16 %v416, %v387
    %v620 = vpack.c.bf16 %v417, %v388
    %v621 = vpack.c.bf16 %v418, %v389
    %v622 = vpack.c.bf16 %v448, %v419
    %v623 = vpack.c.bf16 %v449, %v420
    %v624 = vpack.c.bf16 %v450, %v421
    %v625 = vpack.c.bf16 %v451, %v422
    %v626 = vpack.c.bf16 %v452, %v423
    %v627 = vpack.c.bf16 %v453, %v424
    %v628 = vpack.c.bf16 %v454, %v425
    %v629 = vpack.c.bf16 %v455, %v426
    %v630 = vpack.c.bf16 %v456, %v427
    %v631 = vpack.c.bf16 %v457, %v428
    %v632 = vpack.c.bf16 %v458, %v429
    %v633 = vpack.c.bf16 %v459, %v430
    %v634 = vpack.c.bf16 %v460, %v431
    %v635 = vpack.c.bf16 %v461, %v432
    %v636 = vpack.c.bf16 %v462, %v433
    %v637 = vpack.c.bf16 %v463, %v434
    %v638 = vpack.c.bf16 %v464, %v435
    %v639 = vpack.c.bf16 %v465, %v436
    %v640 = vpack.c.bf16 %v466, %v437
    %v641 = vpack.c.bf16 %v467, %v438
    %v642 = vpack.c.bf16 %v468, %v439
    %v643 = vpack.c.bf16 %v469, %v440
    %v644 = vpack.c.bf16 %v470, %v441
    %v645 = vpack.c.bf16 %v471, %v442
    %v646 = vpack.c.bf16 %v472, %v443
    %v647 = vpack.c.bf16 %v473, %v444
    %v648 = vpack.c.bf16 %v474, %v445
    %v649 = vpack.c.bf16 %v475, %v446
    %v650 = vpack.c.bf16 %v476, %v447
    %v651 = vpack.c.bf16 %v506, %v477
    %v652 = vpack.c.bf16 %v507, %v478
    %v653 = vpack.c.bf16 %v508, %v479
    %v654 = vpack.c.bf16 %v509, %v480
    %v655 = vpack.c.bf16 %v510, %v481
    %v656 = vpack.c.bf16 %v511, %v482
    %v657 = vpack.c.bf16 %v512, %v483
    %v658 = vpack.c.bf16 %v513, %v484
    %v659 = vpack.c.bf16 %v514, %v485
    %v660 = vpack.c.bf16 %v515, %v486
    %v661 = vpack.c.bf16 %v516, %v487
    %v662 = vpack.c.bf16 %v517, %v488
    %v663 = vpack.c.bf16 %v518, %v489
    %v664 = vpack.c.bf16 %v519, %v490
    %v665 = vpack.c.bf16 %v520, %v491
    %v666 = vpack.c.bf16 %v521, %v492
    %v667 = vpack.c.bf16 %v522, %v493
    %v668 = vpack.c.bf16 %v523, %v494
    %v669 = vpack.c.bf16 %v524, %v495
    %v670 = vpack.c.bf16 %v525, %v496
    %v671 = vpack.c.bf16 %v526, %v497
    %v672 = vpack.c.bf16 %v527, %v498
    %v673 = vpack.c.bf16 %v528, %v499
    %v674 = vpack.c.bf16 %v529, %v500
    %v675 = vpack.c.bf16 %v530, %v501
    %v676 = vpack.c.bf16 %v531, %v502
    %v677 = vpack.c.bf16 %v532, %v503
    %v678 = vpack.c.bf16 %v533, %v504
    %v679 = vpack.c.bf16 %v534, %v505
    %v680 = vpack.c.bf16 %v564, %v535
    %v681 = vpack.c.bf16 %v565, %v536
    %v682 = vpack.c.bf16 %v566, %v537
    %v683 = vpack.c.bf16 %v567, %v538
    %v684 = vpack.c.bf16 %v568, %v539
    %v685 = vpack.c.bf16 %v569, %v540
    %v686 = vpack.c.bf16 %v570, %v541
    %v687 = vpack.c.bf16 %v571, %v542
    %v688 = vpack.c.bf16 %v572, %v543
    %v689 = vpack.c.bf16 %v573, %v544
    %v690 = vpack.c.bf16 %v574, %v545
    %v691 = vpack.c.bf16 %v575, %v546
    %v692 = vpack.c.bf16 %v576, %v547
    %v693 = vpack.c.bf16 %v577, %v548
    %v694 = vpack.c.bf16 %v578, %v549
    %v695 = vpack.c.bf16 %v579, %v550
    %v696 = vpack.c.bf16 %v580, %v551
    %v697 = vpack.c.bf16 %v581, %v552
    %v698 = vpack.c.bf16 %v582, %v553
    %v699 = vpack.c.bf16 %v583, %v554
    %v700 = vpack.c.bf16 %v584, %v555
    %v701 = vpack.c.bf16 %v585, %v556
    %v702 = vpack.c.bf16 %v586, %v557
    %v703 = vpack.c.bf16 %v587, %v558
    %v704 = vpack.c.bf16 %v588, %v559
    %v705 = vpack.c.bf16 %v589, %v560
    %v706 = vpack.c.bf16 %v590, %v561
    %v707 = vpack.c.bf16 %v591, %v562
    %v708 = vpack.c.bf16 %v592, %v563
    %v709 = vld [vmem:[#allocation6] sm:$0xff]
    %v710 = vld [vmem:[#allocation6 + $0x8] sm:$0xff]
    %v711 = vld [vmem:[#allocation6 + $0x10] sm:$0xff]
    %v712 = vld [vmem:[#allocation6 + $0x18] sm:$0xff]
    %v713 = vld [vmem:[#allocation6 + $0x20] sm:$0xff]
    %v714 = vld [vmem:[#allocation6 + $0x28] sm:$0xff]
    %v715 = vld [vmem:[#allocation6 + $0x30] sm:$0xff]
    %v716 = vld [vmem:[#allocation6 + $0x38] sm:$0xff]
    %v717 = vld [vmem:[#allocation6 + $0x40] sm:$0xff]
    %v718 = vld [vmem:[#allocation6 + $0x48] sm:$0xff]
    %v719 = vld [vmem:[#allocation6 + $0x50] sm:$0xff]
    %v720 = vld [vmem:[#allocation6 + $0x58] sm:$0xff]
    %v721 = vld [vmem:[#allocation6 + $0x60] sm:$0xff]
    %v722 = vld [vmem:[#allocation6 + $0x68] sm:$0xff]
    %v723 = vld [vmem:[#allocation6 + $0x70] sm:$0xf]
    %v724 = vld [vmem:[#allocation6 + $0x74] sm:$0xff]
    %v725 = vld [vmem:[#allocation6 + $0x7c] sm:$0xff]
    %v726 = vld [vmem:[#allocation6 + $0x84] sm:$0xff]
    %v727 = vld [vmem:[#allocation6 + $0x8c] sm:$0xff]
    %v728 = vld [vmem:[#allocation6 + $0x94] sm:$0xff]
    %v729 = vld [vmem:[#allocation6 + $0x9c] sm:$0xff]
    %v730 = vld [vmem:[#allocation6 + $0xa4] sm:$0xff]
    %v731 = vld [vmem:[#allocation6 + $0xac] sm:$0xff]
    %v732 = vld [vmem:[#allocation6 + $0xb4] sm:$0xff]
    %v733 = vld [vmem:[#allocation6 + $0xbc] sm:$0xff]
    %v734 = vld [vmem:[#allocation6 + $0xc4] sm:$0xff]
    %v735 = vld [vmem:[#allocation6 + $0xcc] sm:$0xff]
    %v736 = vld [vmem:[#allocation6 + $0xd4] sm:$0xff]
    %v737 = vld [vmem:[#allocation6 + $0xdc] sm:$0xff]
    %v738 = vld [vmem:[#allocation6 + $0xe4] sm:$0xf]
    %v769 = vunpack.c.l.b16 %v709
    %v770 = vunpack.c.h.b16 %v709
    %v771 = vunpack.c.l.b16 %v710
    %v772 = vunpack.c.h.b16 %v710
    %v773 = vunpack.c.l.b16 %v711
    %v774 = vunpack.c.h.b16 %v711
    %v775 = vunpack.c.l.b16 %v712
    %v776 = vunpack.c.h.b16 %v712
    %v777 = vunpack.c.l.b16 %v713
    %v778 = vunpack.c.h.b16 %v713
    %v779 = vunpack.c.l.b16 %v714
    %v780 = vunpack.c.h.b16 %v714
    %v781 = vunpack.c.l.b16 %v715
    %v782 = vunpack.c.h.b16 %v715
    %v783 = vunpack.c.l.b16 %v716
    %v784 = vunpack.c.h.b16 %v716
    %v785 = vunpack.c.l.b16 %v717
    %v786 = vunpack.c.h.b16 %v717
    %v787 = vunpack.c.l.b16 %v718
    %v788 = vunpack.c.h.b16 %v718
    %v789 = vunpack.c.l.b16 %v719
    %v790 = vunpack.c.h.b16 %v719
    %v791 = vunpack.c.l.b16 %v720
    %v792 = vunpack.c.h.b16 %v720
    %v793 = vunpack.c.l.b16 %v721
    %v794 = vunpack.c.h.b16 %v721
    %v795 = vunpack.c.l.b16 %v722
    %v796 = vunpack.c.h.b16 %v722
    %v797 = vunpack.c.l.b16 %v723
    %v798 = vunpack.c.l.b16 %v724
    %v799 = vunpack.c.h.b16 %v724
    %v800 = vunpack.c.l.b16 %v725
    %v801 = vunpack.c.h.b16 %v725
    %v802 = vunpack.c.l.b16 %v726
    %v803 = vunpack.c.h.b16 %v726
    %v804 = vunpack.c.l.b16 %v727
    %v805 = vunpack.c.h.b16 %v727
    %v806 = vunpack.c.l.b16 %v728
    %v807 = vunpack.c.h.b16 %v728
    %v808 = vunpack.c.l.b16 %v729
    %v809 = vunpack.c.h.b16 %v729
    %v810 = vunpack.c.l.b16 %v730
    %v811 = vunpack.c.h.b16 %v730
    %v812 = vunpack.c.l.b16 %v731
    %v813 = vunpack.c.h.b16 %v731
    %v814 = vunpack.c.l.b16 %v732
    %v815 = vunpack.c.h.b16 %v732
    %v816 = vunpack.c.l.b16 %v733
    %v817 = vunpack.c.h.b16 %v733
    %v818 = vunpack.c.l.b16 %v734
    %v819 = vunpack.c.h.b16 %v734
    %v820 = vunpack.c.l.b16 %v735
    %v821 = vunpack.c.h.b16 %v735
    %v822 = vunpack.c.l.b16 %v736
    %v823 = vunpack.c.h.b16 %v736
    %v824 = vunpack.c.l.b16 %v737
    %v825 = vunpack.c.h.b16 %v737
    %v826 = vunpack.c.l.b16 %v738
    %v827 = vpack.c.b16 %v798, %v769
    %v828 = vpack.c.b16 %v799, %v770
    %v829 = vpack.c.b16 %v800, %v771
    %v830 = vpack.c.b16 %v801, %v772
    %v831 = vpack.c.b16 %v802, %v773
    %v832 = vpack.c.b16 %v803, %v774
    %v833 = vpack.c.b16 %v804, %v775
    %v834 = vpack.c.b16 %v805, %v776
    %v835 = vpack.c.b16 %v806, %v777
    %v836 = vpack.c.b16 %v807, %v778
    %v837 = vpack.c.b16 %v808, %v779
    %v838 = vpack.c.b16 %v809, %v780
    %v839 = vpack.c.b16 %v810, %v781
    %v840 = vpack.c.b16 %v811, %v782
    %v841 = vpack.c.b16 %v812, %v783
    %v842 = vpack.c.b16 %v813, %v784
    %v843 = vpack.c.b16 %v814, %v785
    %v844 = vpack.c.b16 %v815, %v786
    %v845 = vpack.c.b16 %v816, %v787
    %v846 = vpack.c.b16 %v817, %v788
    %v847 = vpack.c.b16 %v818, %v789
    %v848 = vpack.c.b16 %v819, %v790
    %v849 = vpack.c.b16 %v820, %v791
    %v850 = vpack.c.b16 %v821, %v792
    %v851 = vpack.c.b16 %v822, %v793
    %v852 = vpack.c.b16 %v823, %v794
    %v853 = vpack.c.b16 %v824, %v795
    %v854 = vpack.c.b16 %v825, %v796
    %v855 = vpack.c.b16 %v826, %v797
    %885 = vmatpush.bf16.xpose.msra.mxu0 0
    %886 = vmatpush.bf16.xpose.msra.mxu0 0
    %887 = vmatpush.bf16.xpose.msra.mxu0 0
    %888 = vmatpush.bf16.xpose.msra.mxu0 0
    %889 = vmatpush.bf16.xpose.msra.mxu0 0
    %890 = vmatpush.bf16.xpose.msra.mxu0 0
    %891 = vmatpush.bf16.xpose.msra.mxu0 0
    %892 = vmatpush.bf16.xpose.msra.mxu0 %v827
    %893 = vmatmul.bf16.gmra.mxu0 %v593
    %v894 = vpop.f32.mrf.mxu0
    %v895 = vadd.f32 0.0, %v894
    %v896 = vpop.f32.mrf.mxu0
    %v897 = vadd.f32 0.0, %v896
    %898 = vmatmul.bf16.gmra.mxu0 %v622
    %v899 = vpop.f32.mrf.mxu0
    %v900 = vadd.f32 0.0, %v899
    %v901 = vpop.f32.mrf.mxu0
    %v902 = vadd.f32 0.0, %v901
    %903 = vmatmul.bf16.gmra.mxu0 %v651
    %v904 = vpop.f32.mrf.mxu0
    %v905 = vadd.f32 0.0, %v904
    %v906 = vpop.f32.mrf.mxu0
    %v907 = vadd.f32 0.0, %v906
    %908 = vmatmul.bf16.gmra.mxu0 %v680
    %v909 = vpop.f32.mrf.mxu0
    %v910 = vadd.f32 0.0, %v909
    %v911 = vpop.f32.mrf.mxu0
    %v912 = vadd.f32 0.0, %v911
    %913 = vdwg.mxu0
    %914 = vmatpush.bf16.xpose.msra.mxu0 0
    %915 = vmatpush.bf16.xpose.msra.mxu0 0
    %916 = vmatpush.bf16.xpose.msra.mxu0 0
    %917 = vmatpush.bf16.xpose.msra.mxu0 0
    %918 = vmatpush.bf16.xpose.msra.mxu0 0
    %919 = vmatpush.bf16.xpose.msra.mxu0 0
    %920 = vmatpush.bf16.xpose.msra.mxu0 0
    %921 = vmatpush.bf16.xpose.msra.mxu0 %v828
    %922 = vmatmul.bf16.gmra.mxu0 %v594
    %v923 = vpop.f32.mrf.mxu0
    %v924 = vadd.f32 %v895, %v923
    %v925 = vpop.f32.mrf.mxu0
    %v926 = vadd.f32 %v897, %v925
    %927 = vmatmul.bf16.gmra.mxu0 %v623
    %v928 = vpop.f32.mrf.mxu0
    %v929 = vadd.f32 %v900, %v928
    %v930 = vpop.f32.mrf.mxu0
    %v931 = vadd.f32 %v902, %v930
    %932 = vmatmul.bf16.gmra.mxu0 %v652
    %v933 = vpop.f32.mrf.mxu0
    %v934 = vadd.f32 %v905, %v933
    %v935 = vpop.f32.mrf.mxu0
    %v936 = vadd.f32 %v907, %v935
    %937 = vmatmul.bf16.gmra.mxu0 %v681
    %v938 = vpop.f32.mrf.mxu0
    %v939 = vadd.f32 %v910, %v938
    %v940 = vpop.f32.mrf.mxu0
    %v941 = vadd.f32 %v912, %v940
    %942 = vdwg.mxu0
    %943 = vmatpush.bf16.xpose.msra.mxu0 0
    %944 = vmatpush.bf16.xpose.msra.mxu0 0
    %945 = vmatpush.bf16.xpose.msra.mxu0 0
    %946 = vmatpush.bf16.xpose.msra.mxu0 0
    %947 = vmatpush.bf16.xpose.msra.mxu0 0
    %948 = vmatpush.bf16.xpose.msra.mxu0 0
    %949 = vmatpush.bf16.xpose.msra.mxu0 0
    %950 = vmatpush.bf16.xpose.msra.mxu0 %v829
    %951 = vmatmul.bf16.gmra.mxu0 %v595
    %v952 = vpop.f32.mrf.mxu0
    %v953 = vadd.f32 %v924, %v952
    %v954 = vpop.f32.mrf.mxu0
    %v955 = vadd.f32 %v926, %v954
    %956 = vmatmul.bf16.gmra.mxu0 %v624
    %v957 = vpop.f32.mrf.mxu0
    %v958 = vadd.f32 %v929, %v957
    %v959 = vpop.f32.mrf.mxu0
    %v960 = vadd.f32 %v931, %v959
    %961 = vmatmul.bf16.gmra.mxu0 %v653
    %v962 = vpop.f32.mrf.mxu0
    %v963 = vadd.f32 %v934, %v962
    %v964 = vpop.f32.mrf.mxu0
    %v965 = vadd.f32 %v936, %v964
    %966 = vmatmul.bf16.gmra.mxu0 %v682
    %v967 = vpop.f32.mrf.mxu0
    %v968 = vadd.f32 %v939, %v967
    %v969 = vpop.f32.mrf.mxu0
    %v970 = vadd.f32 %v941, %v969
    %971 = vdwg.mxu0
    %972 = vmatpush.bf16.xpose.msra.mxu0 0
    %973 = vmatpush.bf16.xpose.msra.mxu0 0
    %974 = vmatpush.bf16.xpose.msra.mxu0 0
    %975 = vmatpush.bf16.xpose.msra.mxu0 0
    %976 = vmatpush.bf16.xpose.msra.mxu0 0
    %977 = vmatpush.bf16.xpose.msra.mxu0 0
    %978 = vmatpush.bf16.xpose.msra.mxu0 0
    %979 = vmatpush.bf16.xpose.msra.mxu0 %v830
    %980 = vmatmul.bf16.gmra.mxu0 %v596
    %v981 = vpop.f32.mrf.mxu0
    %v982 = vadd.f32 %v953, %v981
    %v983 = vpop.f32.mrf.mxu0
    %v984 = vadd.f32 %v955, %v983
    %985 = vmatmul.bf16.gmra.mxu0 %v625
    %v986 = vpop.f32.mrf.mxu0
    %v987 = vadd.f32 %v958, %v986
    %v988 = vpop.f32.mrf.mxu0
    %v989 = vadd.f32 %v960, %v988
    %990 = vmatmul.bf16.gmra.mxu0 %v654
    %v991 = vpop.f32.mrf.mxu0
    %v992 = vadd.f32 %v963, %v991
    %v993 = vpop.f32.mrf.mxu0
    %v994 = vadd.f32 %v965, %v993
    %995 = vmatmul.bf16.gmra.mxu0 %v683
    %v996 = vpop.f32.mrf.mxu0
    %v997 = vadd.f32 %v968, %v996
    %v998 = vpop.f32.mrf.mxu0
    %v999 = vadd.f32 %v970, %v998
    %1000 = vdwg.mxu0
    %1001 = vmatpush.bf16.xpose.msra.mxu0 0
    %1002 = vmatpush.bf16.xpose.msra.mxu0 0
    %1003 = vmatpush.bf16.xpose.msra.mxu0 0
    %1004 = vmatpush.bf16.xpose.msra.mxu0 0
    %1005 = vmatpush.bf16.xpose.msra.mxu0 0
    %1006 = vmatpush.bf16.xpose.msra.mxu0 0
    %1007 = vmatpush.bf16.xpose.msra.mxu0 0
    %1008 = vmatpush.bf16.xpose.msra.mxu0 %v831
    %1009 = vmatmul.bf16.gmra.mxu0 %v597
    %v1010 = vpop.f32.mrf.mxu0
    %v1011 = vadd.f32 %v982, %v1010
    %v1012 = vpop.f32.mrf.mxu0
    %v1013 = vadd.f32 %v984, %v1012
    %1014 = vmatmul.bf16.gmra.mxu0 %v626
    %v1015 = vpop.f32.mrf.mxu0
    %v1016 = vadd.f32 %v987, %v1015
    %v1017 = vpop.f32.mrf.mxu0
    %v1018 = vadd.f32 %v989, %v1017
    %1019 = vmatmul.bf16.gmra.mxu0 %v655
    %v1020 = vpop.f32.mrf.mxu0
    %v1021 = vadd.f32 %v992, %v1020
    %v1022 = vpop.f32.mrf.mxu0
    %v1023 = vadd.f32 %v994, %v1022
    %1024 = vmatmul.bf16.gmra.mxu0 %v684
    %v1025 = vpop.f32.mrf.mxu0
    %v1026 = vadd.f32 %v997, %v1025
    %v1027 = vpop.f32.mrf.mxu0
    %v1028 = vadd.f32 %v999, %v1027
    %1029 = vdwg.mxu0
    %1030 = vmatpush.bf16.xpose.msra.mxu0 0
    %1031 = vmatpush.bf16.xpose.msra.mxu0 0
    %1032 = vmatpush.bf16.xpose.msra.mxu0 0
    %1033 = vmatpush.bf16.xpose.msra.mxu0 0
    %1034 = vmatpush.bf16.xpose.msra.mxu0 0
    %1035 = vmatpush.bf16.xpose.msra.mxu0 0
    %1036 = vmatpush.bf16.xpose.msra.mxu0 0
    %1037 = vmatpush.bf16.xpose.msra.mxu0 %v832
    %1038 = vmatmul.bf16.gmra.mxu0 %v598
    %v1039 = vpop.f32.mrf.mxu0
    %v1040 = vadd.f32 %v1011, %v1039
    %v1041 = vpop.f32.mrf.mxu0
    %v1042 = vadd.f32 %v1013, %v1041
    %1043 = vmatmul.bf16.gmra.mxu0 %v627
    %v1044 = vpop.f32.mrf.mxu0
    %v1045 = vadd.f32 %v1016, %v1044
    %v1046 = vpop.f32.mrf.mxu0
    %v1047 = vadd.f32 %v1018, %v1046
    %1048 = vmatmul.bf16.gmra.mxu0 %v656
    %v1049 = vpop.f32.mrf.mxu0
    %v1050 = vadd.f32 %v1021, %v1049
    %v1051 = vpop.f32.mrf.mxu0
    %v1052 = vadd.f32 %v1023, %v1051
    %1053 = vmatmul.bf16.gmra.mxu0 %v685
    %v1054 = vpop.f32.mrf.mxu0
    %v1055 = vadd.f32 %v1026, %v1054
    %v1056 = vpop.f32.mrf.mxu0
    %v1057 = vadd.f32 %v1028, %v1056
    %1058 = vdwg.mxu0
    %1059 = vmatpush.bf16.xpose.msra.mxu0 0
    %1060 = vmatpush.bf16.xpose.msra.mxu0 0
    %1061 = vmatpush.bf16.xpose.msra.mxu0 0
    %1062 = vmatpush.bf16.xpose.msra.mxu0 0
    %1063 = vmatpush.bf16.xpose.msra.mxu0 0
    %1064 = vmatpush.bf16.xpose.msra.mxu0 0
    %1065 = vmatpush.bf16.xpose.msra.mxu0 0
    %1066 = vmatpush.bf16.xpose.msra.mxu0 %v833
    %1067 = vmatmul.bf16.gmra.mxu0 %v599
    %v1068 = vpop.f32.mrf.mxu0
    %v1069 = vadd.f32 %v1040, %v1068
    %v1070 = vpop.f32.mrf.mxu0
    %v1071 = vadd.f32 %v1042, %v1070
    %1072 = vmatmul.bf16.gmra.mxu0 %v628
    %v1073 = vpop.f32.mrf.mxu0
    %v1074 = vadd.f32 %v1045, %v1073
    %v1075 = vpop.f32.mrf.mxu0
    %v1076 = vadd.f32 %v1047, %v1075
    %1077 = vmatmul.bf16.gmra.mxu0 %v657
    %v1078 = vpop.f32.mrf.mxu0
    %v1079 = vadd.f32 %v1050, %v1078
    %v1080 = vpop.f32.mrf.mxu0
    %v1081 = vadd.f32 %v1052, %v1080
    %1082 = vmatmul.bf16.gmra.mxu0 %v686
    %v1083 = vpop.f32.mrf.mxu0
    %v1084 = vadd.f32 %v1055, %v1083
    %v1085 = vpop.f32.mrf.mxu0
    %v1086 = vadd.f32 %v1057, %v1085
    %1087 = vdwg.mxu0
    %1088 = vmatpush.bf16.xpose.msra.mxu0 0
    %1089 = vmatpush.bf16.xpose.msra.mxu0 0
    %1090 = vmatpush.bf16.xpose.msra.mxu0 0
    %1091 = vmatpush.bf16.xpose.msra.mxu0 0
    %1092 = vmatpush.bf16.xpose.msra.mxu0 0
    %1093 = vmatpush.bf16.xpose.msra.mxu0 0
    %1094 = vmatpush.bf16.xpose.msra.mxu0 0
    %1095 = vmatpush.bf16.xpose.msra.mxu0 %v834
    %1096 = vmatmul.bf16.gmra.mxu0 %v600
    %v1097 = vpop.f32.mrf.mxu0
    %v1098 = vadd.f32 %v1069, %v1097
    %v1099 = vpop.f32.mrf.mxu0
    %v1100 = vadd.f32 %v1071, %v1099
    %1101 = vmatmul.bf16.gmra.mxu0 %v629
    %v1102 = vpop.f32.mrf.mxu0
    %v1103 = vadd.f32 %v1074, %v1102
    %v1104 = vpop.f32.mrf.mxu0
    %v1105 = vadd.f32 %v1076, %v1104
    %1106 = vmatmul.bf16.gmra.mxu0 %v658
    %v1107 = vpop.f32.mrf.mxu0
    %v1108 = vadd.f32 %v1079, %v1107
    %v1109 = vpop.f32.mrf.mxu0
    %v1110 = vadd.f32 %v1081, %v1109
    %1111 = vmatmul.bf16.gmra.mxu0 %v687
    %v1112 = vpop.f32.mrf.mxu0
    %v1113 = vadd.f32 %v1084, %v1112
    %v1114 = vpop.f32.mrf.mxu0
    %v1115 = vadd.f32 %v1086, %v1114
    %1116 = vdwg.mxu0
    %1117 = vmatpush.bf16.xpose.msra.mxu0 0
    %1118 = vmatpush.bf16.xpose.msra.mxu0 0
    %1119 = vmatpush.bf16.xpose.msra.mxu0 0
    %1120 = vmatpush.bf16.xpose.msra.mxu0 0
    %1121 = vmatpush.bf16.xpose.msra.mxu0 0
    %1122 = vmatpush.bf16.xpose.msra.mxu0 0
    %1123 = vmatpush.bf16.xpose.msra.mxu0 0
    %1124 = vmatpush.bf16.xpose.msra.mxu0 %v835
    %1125 = vmatmul.bf16.gmra.mxu0 %v601
    %v1126 = vpop.f32.mrf.mxu0
    %v1127 = vadd.f32 %v1098, %v1126
    %v1128 = vpop.f32.mrf.mxu0
    %v1129 = vadd.f32 %v1100, %v1128
    %1130 = vmatmul.bf16.gmra.mxu0 %v630
    %v1131 = vpop.f32.mrf.mxu0
    %v1132 = vadd.f32 %v1103, %v1131
    %v1133 = vpop.f32.mrf.mxu0
    %v1134 = vadd.f32 %v1105, %v1133
    %1135 = vmatmul.bf16.gmra.mxu0 %v659
    %v1136 = vpop.f32.mrf.mxu0
    %v1137 = vadd.f32 %v1108, %v1136
    %v1138 = vpop.f32.mrf.mxu0
    %v1139 = vadd.f32 %v1110, %v1138
    %1140 = vmatmul.bf16.gmra.mxu0 %v688
    %v1141 = vpop.f32.mrf.mxu0
    %v1142 = vadd.f32 %v1113, %v1141
    %v1143 = vpop.f32.mrf.mxu0
    %v1144 = vadd.f32 %v1115, %v1143
    %1145 = vdwg.mxu0
    %1146 = vmatpush.bf16.xpose.msra.mxu0 0
    %1147 = vmatpush.bf16.xpose.msra.mxu0 0
    %1148 = vmatpush.bf16.xpose.msra.mxu0 0
    %1149 = vmatpush.bf16.xpose.msra.mxu0 0
    %1150 = vmatpush.bf16.xpose.msra.mxu0 0
    %1151 = vmatpush.bf16.xpose.msra.mxu0 0
    %1152 = vmatpush.bf16.xpose.msra.mxu0 0
    %1153 = vmatpush.bf16.xpose.msra.mxu0 %v836
    %1154 = vmatmul.bf16.gmra.mxu0 %v602
    %v1155 = vpop.f32.mrf.mxu0
    %v1156 = vadd.f32 %v1127, %v1155
    %v1157 = vpop.f32.mrf.mxu0
    %v1158 = vadd.f32 %v1129, %v1157
    %1159 = vmatmul.bf16.gmra.mxu0 %v631
    %v1160 = vpop.f32.mrf.mxu0
    %v1161 = vadd.f32 %v1132, %v1160
    %v1162 = vpop.f32.mrf.mxu0
    %v1163 = vadd.f32 %v1134, %v1162
    %1164 = vmatmul.bf16.gmra.mxu0 %v660
    %v1165 = vpop.f32.mrf.mxu0
    %v1166 = vadd.f32 %v1137, %v1165
    %v1167 = vpop.f32.mrf.mxu0
    %v1168 = vadd.f32 %v1139, %v1167
    %1169 = vmatmul.bf16.gmra.mxu0 %v689
    %v1170 = vpop.f32.mrf.mxu0
    %v1171 = vadd.f32 %v1142, %v1170
    %v1172 = vpop.f32.mrf.mxu0
    %v1173 = vadd.f32 %v1144, %v1172
    %1174 = vdwg.mxu0
    %1175 = vmatpush.bf16.xpose.msra.mxu0 0
    %1176 = vmatpush.bf16.xpose.msra.mxu0 0
    %1177 = vmatpush.bf16.xpose.msra.mxu0 0
    %1178 = vmatpush.bf16.xpose.msra.mxu0 0
    %1179 = vmatpush.bf16.xpose.msra.mxu0 0
    %1180 = vmatpush.bf16.xpose.msra.mxu0 0
    %1181 = vmatpush.bf16.xpose.msra.mxu0 0
    %1182 = vmatpush.bf16.xpose.msra.mxu0 %v837
    %1183 = vmatmul.bf16.gmra.mxu0 %v603
    %v1184 = vpop.f32.mrf.mxu0
    %v1185 = vadd.f32 %v1156, %v1184
    %v1186 = vpop.f32.mrf.mxu0
    %v1187 = vadd.f32 %v1158, %v1186
    %1188 = vmatmul.bf16.gmra.mxu0 %v632
    %v1189 = vpop.f32.mrf.mxu0
    %v1190 = vadd.f32 %v1161, %v1189
    %v1191 = vpop.f32.mrf.mxu0
    %v1192 = vadd.f32 %v1163, %v1191
    %1193 = vmatmul.bf16.gmra.mxu0 %v661
    %v1194 = vpop.f32.mrf.mxu0
    %v1195 = vadd.f32 %v1166, %v1194
    %v1196 = vpop.f32.mrf.mxu0
    %v1197 = vadd.f32 %v1168, %v1196
    %1198 = vmatmul.bf16.gmra.mxu0 %v690
    %v1199 = vpop.f32.mrf.mxu0
    %v1200 = vadd.f32 %v1171, %v1199
    %v1201 = vpop.f32.mrf.mxu0
    %v1202 = vadd.f32 %v1173, %v1201
    %1203 = vdwg.mxu0
    %1204 = vmatpush.bf16.xpose.msra.mxu0 0
    %1205 = vmatpush.bf16.xpose.msra.mxu0 0
    %1206 = vmatpush.bf16.xpose.msra.mxu0 0
    %1207 = vmatpush.bf16.xpose.msra.mxu0 0
    %1208 = vmatpush.bf16.xpose.msra.mxu0 0
    %1209 = vmatpush.bf16.xpose.msra.mxu0 0
    %1210 = vmatpush.bf16.xpose.msra.mxu0 0
    %1211 = vmatpush.bf16.xpose.msra.mxu0 %v838
    %1212 = vmatmul.bf16.gmra.mxu0 %v604
    %v1213 = vpop.f32.mrf.mxu0
    %v1214 = vadd.f32 %v1185, %v1213
    %v1215 = vpop.f32.mrf.mxu0
    %v1216 = vadd.f32 %v1187, %v1215
    %1217 = vmatmul.bf16.gmra.mxu0 %v633
    %v1218 = vpop.f32.mrf.mxu0
    %v1219 = vadd.f32 %v1190, %v1218
    %v1220 = vpop.f32.mrf.mxu0
    %v1221 = vadd.f32 %v1192, %v1220
    %1222 = vmatmul.bf16.gmra.mxu0 %v662
    %v1223 = vpop.f32.mrf.mxu0
    %v1224 = vadd.f32 %v1195, %v1223
    %v1225 = vpop.f32.mrf.mxu0
    %v1226 = vadd.f32 %v1197, %v1225
    %1227 = vmatmul.bf16.gmra.mxu0 %v691
    %v1228 = vpop.f32.mrf.mxu0
    %v1229 = vadd.f32 %v1200, %v1228
    %v1230 = vpop.f32.mrf.mxu0
    %v1231 = vadd.f32 %v1202, %v1230
    %1232 = vdwg.mxu0
    %1233 = vmatpush.bf16.xpose.msra.mxu0 0
    %1234 = vmatpush.bf16.xpose.msra.mxu0 0
    %1235 = vmatpush.bf16.xpose.msra.mxu0 0
    %1236 = vmatpush.bf16.xpose.msra.mxu0 0
    %1237 = vmatpush.bf16.xpose.msra.mxu0 0
    %1238 = vmatpush.bf16.xpose.msra.mxu0 0
    %1239 = vmatpush.bf16.xpose.msra.mxu0 0
    %1240 = vmatpush.bf16.xpose.msra.mxu0 %v839
    %1241 = vmatmul.bf16.gmra.mxu0 %v605
    %v1242 = vpop.f32.mrf.mxu0
    %v1243 = vadd.f32 %v1214, %v1242
    %v1244 = vpop.f32.mrf.mxu0
    %v1245 = vadd.f32 %v1216, %v1244
    %1246 = vmatmul.bf16.gmra.mxu0 %v634
    %v1247 = vpop.f32.mrf.mxu0
    %v1248 = vadd.f32 %v1219, %v1247
    %v1249 = vpop.f32.mrf.mxu0
    %v1250 = vadd.f32 %v1221, %v1249
    %1251 = vmatmul.bf16.gmra.mxu0 %v663
    %v1252 = vpop.f32.mrf.mxu0
    %v1253 = vadd.f32 %v1224, %v1252
    %v1254 = vpop.f32.mrf.mxu0
    %v1255 = vadd.f32 %v1226, %v1254
    %1256 = vmatmul.bf16.gmra.mxu0 %v692
    %v1257 = vpop.f32.mrf.mxu0
    %v1258 = vadd.f32 %v1229, %v1257
    %v1259 = vpop.f32.mrf.mxu0
    %v1260 = vadd.f32 %v1231, %v1259
    %1261 = vdwg.mxu0
    %1262 = vmatpush.bf16.xpose.msra.mxu0 0
    %1263 = vmatpush.bf16.xpose.msra.mxu0 0
    %1264 = vmatpush.bf16.xpose.msra.mxu0 0
    %1265 = vmatpush.bf16.xpose.msra.mxu0 0
    %1266 = vmatpush.bf16.xpose.msra.mxu0 0
    %1267 = vmatpush.bf16.xpose.msra.mxu0 0
    %1268 = vmatpush.bf16.xpose.msra.mxu0 0
    %1269 = vmatpush.bf16.xpose.msra.mxu0 %v840
    %1270 = vmatmul.bf16.gmra.mxu0 %v606
    %v1271 = vpop.f32.mrf.mxu0
    %v1272 = vadd.f32 %v1243, %v1271
    %v1273 = vpop.f32.mrf.mxu0
    %v1274 = vadd.f32 %v1245, %v1273
    %1275 = vmatmul.bf16.gmra.mxu0 %v635
    %v1276 = vpop.f32.mrf.mxu0
    %v1277 = vadd.f32 %v1248, %v1276
    %v1278 = vpop.f32.mrf.mxu0
    %v1279 = vadd.f32 %v1250, %v1278
    %1280 = vmatmul.bf16.gmra.mxu0 %v664
    %v1281 = vpop.f32.mrf.mxu0
    %v1282 = vadd.f32 %v1253, %v1281
    %v1283 = vpop.f32.mrf.mxu0
    %v1284 = vadd.f32 %v1255, %v1283
    %1285 = vmatmul.bf16.gmra.mxu0 %v693
    %v1286 = vpop.f32.mrf.mxu0
    %v1287 = vadd.f32 %v1258, %v1286
    %v1288 = vpop.f32.mrf.mxu0
    %v1289 = vadd.f32 %v1260, %v1288
    %1290 = vdwg.mxu0
    %1291 = vmatpush.bf16.xpose.msra.mxu0 0
    %1292 = vmatpush.bf16.xpose.msra.mxu0 0
    %1293 = vmatpush.bf16.xpose.msra.mxu0 0
    %1294 = vmatpush.bf16.xpose.msra.mxu0 0
    %1295 = vmatpush.bf16.xpose.msra.mxu0 0
    %1296 = vmatpush.bf16.xpose.msra.mxu0 0
    %1297 = vmatpush.bf16.xpose.msra.mxu0 0
    %1298 = vmatpush.bf16.xpose.msra.mxu0 %v841
    %1299 = vmatmul.bf16.gmra.mxu0 %v607
    %v1300 = vpop.f32.mrf.mxu0
    %v1301 = vadd.f32 %v1272, %v1300
    %v1302 = vpop.f32.mrf.mxu0
    %v1303 = vadd.f32 %v1274, %v1302
    %1304 = vmatmul.bf16.gmra.mxu0 %v636
    %v1305 = vpop.f32.mrf.mxu0
    %v1306 = vadd.f32 %v1277, %v1305
    %v1307 = vpop.f32.mrf.mxu0
    %v1308 = vadd.f32 %v1279, %v1307
    %1309 = vmatmul.bf16.gmra.mxu0 %v665
    %v1310 = vpop.f32.mrf.mxu0
    %v1311 = vadd.f32 %v1282, %v1310
    %v1312 = vpop.f32.mrf.mxu0
    %v1313 = vadd.f32 %v1284, %v1312
    %1314 = vmatmul.bf16.gmra.mxu0 %v694
    %v1315 = vpop.f32.mrf.mxu0
    %v1316 = vadd.f32 %v1287, %v1315
    %v1317 = vpop.f32.mrf.mxu0
    %v1318 = vadd.f32 %v1289, %v1317
    %1319 = vdwg.mxu0
    %1320 = vmatpush.bf16.xpose.msra.mxu0 0
    %1321 = vmatpush.bf16.xpose.msra.mxu0 0
    %1322 = vmatpush.bf16.xpose.msra.mxu0 0
    %1323 = vmatpush.bf16.xpose.msra.mxu0 0
    %1324 = vmatpush.bf16.xpose.msra.mxu0 0
    %1325 = vmatpush.bf16.xpose.msra.mxu0 0
    %1326 = vmatpush.bf16.xpose.msra.mxu0 0
    %1327 = vmatpush.bf16.xpose.msra.mxu0 %v842
    %1328 = vmatmul.bf16.gmra.mxu0 %v608
    %v1329 = vpop.f32.mrf.mxu0
    %v1330 = vadd.f32 %v1301, %v1329
    %v1331 = vpop.f32.mrf.mxu0
    %v1332 = vadd.f32 %v1303, %v1331
    %1333 = vmatmul.bf16.gmra.mxu0 %v637
    %v1334 = vpop.f32.mrf.mxu0
    %v1335 = vadd.f32 %v1306, %v1334
    %v1336 = vpop.f32.mrf.mxu0
    %v1337 = vadd.f32 %v1308, %v1336
    %1338 = vmatmul.bf16.gmra.mxu0 %v666
    %v1339 = vpop.f32.mrf.mxu0
    %v1340 = vadd.f32 %v1311, %v1339
    %v1341 = vpop.f32.mrf.mxu0
    %v1342 = vadd.f32 %v1313, %v1341
    %1343 = vmatmul.bf16.gmra.mxu0 %v695
    %v1344 = vpop.f32.mrf.mxu0
    %v1345 = vadd.f32 %v1316, %v1344
    %v1346 = vpop.f32.mrf.mxu0
    %v1347 = vadd.f32 %v1318, %v1346
    %1348 = vdwg.mxu0
    %1349 = vmatpush.bf16.xpose.msra.mxu0 0
    %1350 = vmatpush.bf16.xpose.msra.mxu0 0
    %1351 = vmatpush.bf16.xpose.msra.mxu0 0
    %1352 = vmatpush.bf16.xpose.msra.mxu0 0
    %1353 = vmatpush.bf16.xpose.msra.mxu0 0
    %1354 = vmatpush.bf16.xpose.msra.mxu0 0
    %1355 = vmatpush.bf16.xpose.msra.mxu0 0
    %1356 = vmatpush.bf16.xpose.msra.mxu0 %v843
    %1357 = vmatmul.bf16.gmra.mxu0 %v609
    %v1358 = vpop.f32.mrf.mxu0
    %v1359 = vadd.f32 %v1330, %v1358
    %v1360 = vpop.f32.mrf.mxu0
    %v1361 = vadd.f32 %v1332, %v1360
    %1362 = vmatmul.bf16.gmra.mxu0 %v638
    %v1363 = vpop.f32.mrf.mxu0
    %v1364 = vadd.f32 %v1335, %v1363
    %v1365 = vpop.f32.mrf.mxu0
    %v1366 = vadd.f32 %v1337, %v1365
    %1367 = vmatmul.bf16.gmra.mxu0 %v667
    %v1368 = vpop.f32.mrf.mxu0
    %v1369 = vadd.f32 %v1340, %v1368
    %v1370 = vpop.f32.mrf.mxu0
    %v1371 = vadd.f32 %v1342, %v1370
    %1372 = vmatmul.bf16.gmra.mxu0 %v696
    %v1373 = vpop.f32.mrf.mxu0
    %v1374 = vadd.f32 %v1345, %v1373
    %v1375 = vpop.f32.mrf.mxu0
    %v1376 = vadd.f32 %v1347, %v1375
    %1377 = vdwg.mxu0
    %1378 = vmatpush.bf16.xpose.msra.mxu0 0
    %1379 = vmatpush.bf16.xpose.msra.mxu0 0
    %1380 = vmatpush.bf16.xpose.msra.mxu0 0
    %1381 = vmatpush.bf16.xpose.msra.mxu0 0
    %1382 = vmatpush.bf16.xpose.msra.mxu0 0
    %1383 = vmatpush.bf16.xpose.msra.mxu0 0
    %1384 = vmatpush.bf16.xpose.msra.mxu0 0
    %1385 = vmatpush.bf16.xpose.msra.mxu0 %v844
    %1386 = vmatmul.bf16.gmra.mxu0 %v610
    %v1387 = vpop.f32.mrf.mxu0
    %v1388 = vadd.f32 %v1359, %v1387
    %v1389 = vpop.f32.mrf.mxu0
    %v1390 = vadd.f32 %v1361, %v1389
    %1391 = vmatmul.bf16.gmra.mxu0 %v639
    %v1392 = vpop.f32.mrf.mxu0
    %v1393 = vadd.f32 %v1364, %v1392
    %v1394 = vpop.f32.mrf.mxu0
    %v1395 = vadd.f32 %v1366, %v1394
    %1396 = vmatmul.bf16.gmra.mxu0 %v668
    %v1397 = vpop.f32.mrf.mxu0
    %v1398 = vadd.f32 %v1369, %v1397
    %v1399 = vpop.f32.mrf.mxu0
    %v1400 = vadd.f32 %v1371, %v1399
    %1401 = vmatmul.bf16.gmra.mxu0 %v697
    %v1402 = vpop.f32.mrf.mxu0
    %v1403 = vadd.f32 %v1374, %v1402
    %v1404 = vpop.f32.mrf.mxu0
    %v1405 = vadd.f32 %v1376, %v1404
    %1406 = vdwg.mxu0
    %1407 = vmatpush.bf16.xpose.msra.mxu0 0
    %1408 = vmatpush.bf16.xpose.msra.mxu0 0
    %1409 = vmatpush.bf16.xpose.msra.mxu0 0
    %1410 = vmatpush.bf16.xpose.msra.mxu0 0
    %1411 = vmatpush.bf16.xpose.msra.mxu0 0
    %1412 = vmatpush.bf16.xpose.msra.mxu0 0
    %1413 = vmatpush.bf16.xpose.msra.mxu0 0
    %1414 = vmatpush.bf16.xpose.msra.mxu0 %v845
    %1415 = vmatmul.bf16.gmra.mxu0 %v611
    %v1416 = vpop.f32.mrf.mxu0
    %v1417 = vadd.f32 %v1388, %v1416
    %v1418 = vpop.f32.mrf.mxu0
    %v1419 = vadd.f32 %v1390, %v1418
    %1420 = vmatmul.bf16.gmra.mxu0 %v640
    %v1421 = vpop.f32.mrf.mxu0
    %v1422 = vadd.f32 %v1393, %v1421
    %v1423 = vpop.f32.mrf.mxu0
    %v1424 = vadd.f32 %v1395, %v1423
    %1425 = vmatmul.bf16.gmra.mxu0 %v669
    %v1426 = vpop.f32.mrf.mxu0
    %v1427 = vadd.f32 %v1398, %v1426
    %v1428 = vpop.f32.mrf.mxu0
    %v1429 = vadd.f32 %v1400, %v1428
    %1430 = vmatmul.bf16.gmra.mxu0 %v698
    %v1431 = vpop.f32.mrf.mxu0
    %v1432 = vadd.f32 %v1403, %v1431
    %v1433 = vpop.f32.mrf.mxu0
    %v1434 = vadd.f32 %v1405, %v1433
    %1435 = vdwg.mxu0
    %1436 = vmatpush.bf16.xpose.msra.mxu0 0
    %1437 = vmatpush.bf16.xpose.msra.mxu0 0
    %1438 = vmatpush.bf16.xpose.msra.mxu0 0
    %1439 = vmatpush.bf16.xpose.msra.mxu0 0
    %1440 = vmatpush.bf16.xpose.msra.mxu0 0
    %1441 = vmatpush.bf16.xpose.msra.mxu0 0
    %1442 = vmatpush.bf16.xpose.msra.mxu0 0
    %1443 = vmatpush.bf16.xpose.msra.mxu0 %v846
    %1444 = vmatmul.bf16.gmra.mxu0 %v612
    %v1445 = vpop.f32.mrf.mxu0
    %v1446 = vadd.f32 %v1417, %v1445
    %v1447 = vpop.f32.mrf.mxu0
    %v1448 = vadd.f32 %v1419, %v1447
    %1449 = vmatmul.bf16.gmra.mxu0 %v641
    %v1450 = vpop.f32.mrf.mxu0
    %v1451 = vadd.f32 %v1422, %v1450
    %v1452 = vpop.f32.mrf.mxu0
    %v1453 = vadd.f32 %v1424, %v1452
    %1454 = vmatmul.bf16.gmra.mxu0 %v670
    %v1455 = vpop.f32.mrf.mxu0
    %v1456 = vadd.f32 %v1427, %v1455
    %v1457 = vpop.f32.mrf.mxu0
    %v1458 = vadd.f32 %v1429, %v1457
    %1459 = vmatmul.bf16.gmra.mxu0 %v699
    %v1460 = vpop.f32.mrf.mxu0
    %v1461 = vadd.f32 %v1432, %v1460
    %v1462 = vpop.f32.mrf.mxu0
    %v1463 = vadd.f32 %v1434, %v1462
    %1464 = vdwg.mxu0
    %1465 = vmatpush.bf16.xpose.msra.mxu0 0
    %1466 = vmatpush.bf16.xpose.msra.mxu0 0
    %1467 = vmatpush.bf16.xpose.msra.mxu0 0
    %1468 = vmatpush.bf16.xpose.msra.mxu0 0
    %1469 = vmatpush.bf16.xpose.msra.mxu0 0
    %1470 = vmatpush.bf16.xpose.msra.mxu0 0
    %1471 = vmatpush.bf16.xpose.msra.mxu0 0
    %1472 = vmatpush.bf16.xpose.msra.mxu0 %v847
    %1473 = vmatmul.bf16.gmra.mxu0 %v613
    %v1474 = vpop.f32.mrf.mxu0
    %v1475 = vadd.f32 %v1446, %v1474
    %v1476 = vpop.f32.mrf.mxu0
    %v1477 = vadd.f32 %v1448, %v1476
    %1478 = vmatmul.bf16.gmra.mxu0 %v642
    %v1479 = vpop.f32.mrf.mxu0
    %v1480 = vadd.f32 %v1451, %v1479
    %v1481 = vpop.f32.mrf.mxu0
    %v1482 = vadd.f32 %v1453, %v1481
    %1483 = vmatmul.bf16.gmra.mxu0 %v671
    %v1484 = vpop.f32.mrf.mxu0
    %v1485 = vadd.f32 %v1456, %v1484
    %v1486 = vpop.f32.mrf.mxu0
    %v1487 = vadd.f32 %v1458, %v1486
    %1488 = vmatmul.bf16.gmra.mxu0 %v700
    %v1489 = vpop.f32.mrf.mxu0
    %v1490 = vadd.f32 %v1461, %v1489
    %v1491 = vpop.f32.mrf.mxu0
    %v1492 = vadd.f32 %v1463, %v1491
    %1493 = vdwg.mxu0
    %1494 = vmatpush.bf16.xpose.msra.mxu0 0
    %1495 = vmatpush.bf16.xpose.msra.mxu0 0
    %1496 = vmatpush.bf16.xpose.msra.mxu0 0
    %1497 = vmatpush.bf16.xpose.msra.mxu0 0
    %1498 = vmatpush.bf16.xpose.msra.mxu0 0
    %1499 = vmatpush.bf16.xpose.msra.mxu0 0
    %1500 = vmatpush.bf16.xpose.msra.mxu0 0
    %1501 = vmatpush.bf16.xpose.msra.mxu0 %v848
    %1502 = vmatmul.bf16.gmra.mxu0 %v614
    %v1503 = vpop.f32.mrf.mxu0
    %v1504 = vadd.f32 %v1475, %v1503
    %v1505 = vpop.f32.mrf.mxu0
    %v1506 = vadd.f32 %v1477, %v1505
    %1507 = vmatmul.bf16.gmra.mxu0 %v643
    %v1508 = vpop.f32.mrf.mxu0
    %v1509 = vadd.f32 %v1480, %v1508
    %v1510 = vpop.f32.mrf.mxu0
    %v1511 = vadd.f32 %v1482, %v1510
    %1512 = vmatmul.bf16.gmra.mxu0 %v672
    %v1513 = vpop.f32.mrf.mxu0
    %v1514 = vadd.f32 %v1485, %v1513
    %v1515 = vpop.f32.mrf.mxu0
    %v1516 = vadd.f32 %v1487, %v1515
    %1517 = vmatmul.bf16.gmra.mxu0 %v701
    %v1518 = vpop.f32.mrf.mxu0
    %v1519 = vadd.f32 %v1490, %v1518
    %v1520 = vpop.f32.mrf.mxu0
    %v1521 = vadd.f32 %v1492, %v1520
    %1522 = vdwg.mxu0
    %1523 = vmatpush.bf16.xpose.msra.mxu0 0
    %1524 = vmatpush.bf16.xpose.msra.mxu0 0
    %1525 = vmatpush.bf16.xpose.msra.mxu0 0
    %1526 = vmatpush.bf16.xpose.msra.mxu0 0
    %1527 = vmatpush.bf16.xpose.msra.mxu0 0
    %1528 = vmatpush.bf16.xpose.msra.mxu0 0
    %1529 = vmatpush.bf16.xpose.msra.mxu0 0
    %1530 = vmatpush.bf16.xpose.msra.mxu0 %v849
    %1531 = vmatmul.bf16.gmra.mxu0 %v615
    %v1532 = vpop.f32.mrf.mxu0
    %v1533 = vadd.f32 %v1504, %v1532
    %v1534 = vpop.f32.mrf.mxu0
    %v1535 = vadd.f32 %v1506, %v1534
    %1536 = vmatmul.bf16.gmra.mxu0 %v644
    %v1537 = vpop.f32.mrf.mxu0
    %v1538 = vadd.f32 %v1509, %v1537
    %v1539 = vpop.f32.mrf.mxu0
    %v1540 = vadd.f32 %v1511, %v1539
    %1541 = vmatmul.bf16.gmra.mxu0 %v673
    %v1542 = vpop.f32.mrf.mxu0
    %v1543 = vadd.f32 %v1514, %v1542
    %v1544 = vpop.f32.mrf.mxu0
    %v1545 = vadd.f32 %v1516, %v1544
    %1546 = vmatmul.bf16.gmra.mxu0 %v702
    %v1547 = vpop.f32.mrf.mxu0
    %v1548 = vadd.f32 %v1519, %v1547
    %v1549 = vpop.f32.mrf.mxu0
    %v1550 = vadd.f32 %v1521, %v1549
    %1551 = vdwg.mxu0
    %1552 = vmatpush.bf16.xpose.msra.mxu0 0
    %1553 = vmatpush.bf16.xpose.msra.mxu0 0
    %1554 = vmatpush.bf16.xpose.msra.mxu0 0
    %1555 = vmatpush.bf16.xpose.msra.mxu0 0
    %1556 = vmatpush.bf16.xpose.msra.mxu0 0
    %1557 = vmatpush.bf16.xpose.msra.mxu0 0
    %1558 = vmatpush.bf16.xpose.msra.mxu0 0
    %1559 = vmatpush.bf16.xpose.msra.mxu0 %v850
    %1560 = vmatmul.bf16.gmra.mxu0 %v616
    %v1561 = vpop.f32.mrf.mxu0
    %v1562 = vadd.f32 %v1533, %v1561
    %v1563 = vpop.f32.mrf.mxu0
    %v1564 = vadd.f32 %v1535, %v1563
    %1565 = vmatmul.bf16.gmra.mxu0 %v645
    %v1566 = vpop.f32.mrf.mxu0
    %v1567 = vadd.f32 %v1538, %v1566
    %v1568 = vpop.f32.mrf.mxu0
    %v1569 = vadd.f32 %v1540, %v1568
    %1570 = vmatmul.bf16.gmra.mxu0 %v674
    %v1571 = vpop.f32.mrf.mxu0
    %v1572 = vadd.f32 %v1543, %v1571
    %v1573 = vpop.f32.mrf.mxu0
    %v1574 = vadd.f32 %v1545, %v1573
    %1575 = vmatmul.bf16.gmra.mxu0 %v703
    %v1576 = vpop.f32.mrf.mxu0
    %v1577 = vadd.f32 %v1548, %v1576
    %v1578 = vpop.f32.mrf.mxu0
    %v1579 = vadd.f32 %v1550, %v1578
    %1580 = vdwg.mxu0
    %1581 = vmatpush.bf16.xpose.msra.mxu0 0
    %1582 = vmatpush.bf16.xpose.msra.mxu0 0
    %1583 = vmatpush.bf16.xpose.msra.mxu0 0
    %1584 = vmatpush.bf16.xpose.msra.mxu0 0
    %1585 = vmatpush.bf16.xpose.msra.mxu0 0
    %1586 = vmatpush.bf16.xpose.msra.mxu0 0
    %1587 = vmatpush.bf16.xpose.msra.mxu0 0
    %1588 = vmatpush.bf16.xpose.msra.mxu0 %v851
    %1589 = vmatmul.bf16.gmra.mxu0 %v617
    %v1590 = vpop.f32.mrf.mxu0
    %v1591 = vadd.f32 %v1562, %v1590
    %v1592 = vpop.f32.mrf.mxu0
    %v1593 = vadd.f32 %v1564, %v1592
    %1594 = vmatmul.bf16.gmra.mxu0 %v646
    %v1595 = vpop.f32.mrf.mxu0
    %v1596 = vadd.f32 %v1567, %v1595
    %v1597 = vpop.f32.mrf.mxu0
    %v1598 = vadd.f32 %v1569, %v1597
    %1599 = vmatmul.bf16.gmra.mxu0 %v675
    %v1600 = vpop.f32.mrf.mxu0
    %v1601 = vadd.f32 %v1572, %v1600
    %v1602 = vpop.f32.mrf.mxu0
    %v1603 = vadd.f32 %v1574, %v1602
    %1604 = vmatmul.bf16.gmra.mxu0 %v704
    %v1605 = vpop.f32.mrf.mxu0
    %v1606 = vadd.f32 %v1577, %v1605
    %v1607 = vpop.f32.mrf.mxu0
    %v1608 = vadd.f32 %v1579, %v1607
    %1609 = vdwg.mxu0
    %1610 = vmatpush.bf16.xpose.msra.mxu0 0
    %1611 = vmatpush.bf16.xpose.msra.mxu0 0
    %1612 = vmatpush.bf16.xpose.msra.mxu0 0
    %1613 = vmatpush.bf16.xpose.msra.mxu0 0
    %1614 = vmatpush.bf16.xpose.msra.mxu0 0
    %1615 = vmatpush.bf16.xpose.msra.mxu0 0
    %1616 = vmatpush.bf16.xpose.msra.mxu0 0
    %1617 = vmatpush.bf16.xpose.msra.mxu0 %v852
    %1618 = vmatmul.bf16.gmra.mxu0 %v618
    %v1619 = vpop.f32.mrf.mxu0
    %v1620 = vadd.f32 %v1591, %v1619
    %v1621 = vpop.f32.mrf.mxu0
    %v1622 = vadd.f32 %v1593, %v1621
    %1623 = vmatmul.bf16.gmra.mxu0 %v647
    %v1624 = vpop.f32.mrf.mxu0
    %v1625 = vadd.f32 %v1596, %v1624
    %v1626 = vpop.f32.mrf.mxu0
    %v1627 = vadd.f32 %v1598, %v1626
    %1628 = vmatmul.bf16.gmra.mxu0 %v676
    %v1629 = vpop.f32.mrf.mxu0
    %v1630 = vadd.f32 %v1601, %v1629
    %v1631 = vpop.f32.mrf.mxu0
    %v1632 = vadd.f32 %v1603, %v1631
    %1633 = vmatmul.bf16.gmra.mxu0 %v705
    %v1634 = vpop.f32.mrf.mxu0
    %v1635 = vadd.f32 %v1606, %v1634
    %v1636 = vpop.f32.mrf.mxu0
    %v1637 = vadd.f32 %v1608, %v1636
    %1638 = vdwg.mxu0
    %1639 = vmatpush.bf16.xpose.msra.mxu0 0
    %1640 = vmatpush.bf16.xpose.msra.mxu0 0
    %1641 = vmatpush.bf16.xpose.msra.mxu0 0
    %1642 = vmatpush.bf16.xpose.msra.mxu0 0
    %1643 = vmatpush.bf16.xpose.msra.mxu0 0
    %1644 = vmatpush.bf16.xpose.msra.mxu0 0
    %1645 = vmatpush.bf16.xpose.msra.mxu0 0
    %1646 = vmatpush.bf16.xpose.msra.mxu0 %v853
    %1647 = vmatmul.bf16.gmra.mxu0 %v619
    %v1648 = vpop.f32.mrf.mxu0
    %v1649 = vadd.f32 %v1620, %v1648
    %v1650 = vpop.f32.mrf.mxu0
    %v1651 = vadd.f32 %v1622, %v1650
    %1652 = vmatmul.bf16.gmra.mxu0 %v648
    %v1653 = vpop.f32.mrf.mxu0
    %v1654 = vadd.f32 %v1625, %v1653
    %v1655 = vpop.f32.mrf.mxu0
    %v1656 = vadd.f32 %v1627, %v1655
    %1657 = vmatmul.bf16.gmra.mxu0 %v677
    %v1658 = vpop.f32.mrf.mxu0
    %v1659 = vadd.f32 %v1630, %v1658
    %v1660 = vpop.f32.mrf.mxu0
    %v1661 = vadd.f32 %v1632, %v1660
    %1662 = vmatmul.bf16.gmra.mxu0 %v706
    %v1663 = vpop.f32.mrf.mxu0
    %v1664 = vadd.f32 %v1635, %v1663
    %v1665 = vpop.f32.mrf.mxu0
    %v1666 = vadd.f32 %v1637, %v1665
    %1667 = vdwg.mxu0
    %1668 = vmatpush.bf16.xpose.msra.mxu0 0
    %1669 = vmatpush.bf16.xpose.msra.mxu0 0
    %1670 = vmatpush.bf16.xpose.msra.mxu0 0
    %1671 = vmatpush.bf16.xpose.msra.mxu0 0
    %1672 = vmatpush.bf16.xpose.msra.mxu0 0
    %1673 = vmatpush.bf16.xpose.msra.mxu0 0
    %1674 = vmatpush.bf16.xpose.msra.mxu0 0
    %1675 = vmatpush.bf16.xpose.msra.mxu0 %v854
    %1676 = vmatmul.bf16.gmra.mxu0 %v620
    %v1677 = vpop.f32.mrf.mxu0
    %v1678 = vadd.f32 %v1649, %v1677
    %v1679 = vpop.f32.mrf.mxu0
    %v1680 = vadd.f32 %v1651, %v1679
    %1681 = vmatmul.bf16.gmra.mxu0 %v649
    %v1682 = vpop.f32.mrf.mxu0
    %v1683 = vadd.f32 %v1654, %v1682
    %v1684 = vpop.f32.mrf.mxu0
    %v1685 = vadd.f32 %v1656, %v1684
    %1686 = vmatmul.bf16.gmra.mxu0 %v678
    %v1687 = vpop.f32.mrf.mxu0
    %v1688 = vadd.f32 %v1659, %v1687
    %v1689 = vpop.f32.mrf.mxu0
    %v1690 = vadd.f32 %v1661, %v1689
    %1691 = vmatmul.bf16.gmra.mxu0 %v707
    %v1692 = vpop.f32.mrf.mxu0
    %v1693 = vadd.f32 %v1664, %v1692
    %v1694 = vpop.f32.mrf.mxu0
    %v1695 = vadd.f32 %v1666, %v1694
    %1696 = vdwg.mxu0
    %1697 = vmatpush.bf16.xpose.msra.mxu0 0
    %1698 = vmatpush.bf16.xpose.msra.mxu0 0
    %1699 = vmatpush.bf16.xpose.msra.mxu0 0
    %1700 = vmatpush.bf16.xpose.msra.mxu0 0
    %1701 = vmatpush.bf16.xpose.msra.mxu0 0
    %1702 = vmatpush.bf16.xpose.msra.mxu0 0
    %1703 = vmatpush.bf16.xpose.msra.mxu0 0
    %1704 = vmatpush.bf16.xpose.msra.mxu0 %v855
    %1705 = vmatmul.bf16.gmra.mxu0 %v621
    %v1706 = vpop.f32.mrf.mxu0
    %v1707 = vadd.f32 %v1678, %v1706
    %v1708 = vpop.f32.mrf.mxu0
    %v1709 = vadd.f32 %v1680, %v1708
    %1710 = vmatmul.bf16.gmra.mxu0 %v650
    %v1711 = vpop.f32.mrf.mxu0
    %v1712 = vadd.f32 %v1683, %v1711
    %v1713 = vpop.f32.mrf.mxu0
    %v1714 = vadd.f32 %v1685, %v1713
    %1715 = vmatmul.bf16.gmra.mxu0 %v679
    %v1716 = vpop.f32.mrf.mxu0
    %v1717 = vadd.f32 %v1688, %v1716
    %v1718 = vpop.f32.mrf.mxu0
    %v1719 = vadd.f32 %v1690, %v1718
    %1720 = vmatmul.bf16.gmra.mxu0 %v708
    %v1721 = vpop.f32.mrf.mxu0
    %v1722 = vadd.f32 %v1693, %v1721
    %v1723 = vpop.f32.mrf.mxu0
    %v1724 = vadd.f32 %v1695, %v1723
    %1725 = vdwg.mxu0
    %v1726 = vld [vmem:[#allocation2] sm:$0xf]
    %v1727 = vld [vmem:[#allocation2 + $0x4] sm:$0xf]
    %v1728 = vld [vmem:[#allocation2 + $0x8] sm:$0xf]
    %v1729 = vld [vmem:[#allocation2 + $0xc] sm:$0xf]
    %v1730 = vld [vmem:[#allocation2 + $0x10] sm:$0xf]
    %v1731 = vld [vmem:[#allocation2 + $0x14] sm:$0xf]
    %v1732 = vld [vmem:[#allocation2 + $0x18] sm:$0xf]
    %v1733 = vld [vmem:[#allocation2 + $0x1c] sm:$0xf]
    %v1734 = vunpack.c.l.bf16 %v1726
    %v1735 = vunpack.c.l.bf16 %v1727
    %v1736 = vunpack.c.l.bf16 %v1728
    %v1737 = vunpack.c.l.bf16 %v1729
    %v1738 = vunpack.c.l.bf16 %v1730
    %v1739 = vunpack.c.l.bf16 %v1731
    %v1740 = vunpack.c.l.bf16 %v1732
    %v1741 = vunpack.c.l.bf16 %v1733
    %v1742 = vld [vmem:[%s3] sm:$0x1]
    %v1744 = vperm.slane %v1742, 0
    %vm1746 = vcmask 523264
    %v1748 = vsel %vm1746, %v1734, 0
    %v1751 = vsel %vm1746, %v1735, 0
    %v1754 = vsel %vm1746, %v1736, 0
    %v1757 = vsel %vm1746, %v1737, 0
    %v1760 = vsel %vm1746, %v1738, 0
    %v1763 = vsel %vm1746, %v1739, 0
    %v1766 = vsel %vm1746, %v1740, 0
    %v1769 = vsel %vm1746, %v1741, 0
    %1771 = vmatpush.msra.mxu0 0.0
    %1772 = vmatpush.msra.mxu0 0.0
    %1773 = vmatpush.msra.mxu0 0.0
    %1774 = vmatpush.msra.mxu0 0.0
    %1775 = vmatpush.msra.mxu0 0.0
    %1776 = vmatpush.msra.mxu0 0.0
    %1777 = vmatpush.msra.mxu0 0.0
    %1778 = vmatpush.msra.mxu0 0.0
    %1779 = vmatpush.msra.mxu0 %v1724
    %1780 = vmatpush.msra.mxu0 %v1722
    %1781 = vmatpush.msra.mxu0 %v1719
    %1782 = vmatpush.msra.mxu0 %v1717
    %1783 = vmatpush.msra.mxu0 %v1714
    %1784 = vmatpush.msra.mxu0 %v1712
    %1785 = vmatpush.msra.mxu0 %v1709
    %1786 = vmatpush.msra.mxu0 %v1707
    %1787 = vmatmul.f32.gmra.mxu0 %v1748
    %v1788 = vpop.f32.mrf.mxu0
    %v1789 = vadd.f32 %v1744, %v1788
    %1790 = vmatmul.f32.gmra.mxu0 %v1751
    %v1791 = vpop.f32.mrf.mxu0
    %v1792 = vadd.f32 %v1744, %v1791
    %1793 = vmatmul.f32.gmra.mxu0 %v1754
    %v1794 = vpop.f32.mrf.mxu0
    %v1795 = vadd.f32 %v1744, %v1794
    %1796 = vmatmul.f32.gmra.mxu0 %v1757
    %v1797 = vpop.f32.mrf.mxu0
    %v1798 = vadd.f32 %v1744, %v1797
    %1799 = vmatmul.f32.gmra.mxu0 %v1760
    %v1800 = vpop.f32.mrf.mxu0
    %v1801 = vadd.f32 %v1744, %v1800
    %1802 = vmatmul.f32.gmra.mxu0 %v1763
    %v1803 = vpop.f32.mrf.mxu0
    %v1804 = vadd.f32 %v1744, %v1803
    %1805 = vmatmul.f32.gmra.mxu0 %v1766
    %v1806 = vpop.f32.mrf.mxu0
    %v1807 = vadd.f32 %v1744, %v1806
    %1808 = vmatmul.f32.gmra.mxu0 %v1769
    %v1809 = vpop.f32.mrf.mxu0
    %v1810 = vadd.f32 %v1744, %v1809
    %1811 = vdwg.mxu0
    %v1812 = vmax.f32 %v1789, 0.0
    %v1813 = vmax.f32 %v1792, 0.0
    %v1814 = vmax.f32 %v1795, 0.0
    %v1815 = vmax.f32 %v1798, 0.0
    %v1816 = vmax.f32 %v1801, 0.0
    %v1817 = vmax.f32 %v1804, 0.0
    %v1818 = vmax.f32 %v1807, 0.0
    %v1819 = vmax.f32 %v1810, 0.0
    %v1820 = vld [vmem:[%s4] sm:$0xff]
    %v1821 = vld [vmem:[%s4 + $0x8] sm:$0xff]
    %vm1822 = vcmask 130048
    %v1824 = vsel %vm1822, %v1812, 0
    %v1827 = vsel %vm1822, %v1813, 0
    %v1830 = vsel %vm1822, %v1814, 0
    %v1833 = vsel %vm1822, %v1815, 0
    %v1836 = vsel %vm1822, %v1816, 0
    %v1839 = vsel %vm1822, %v1817, 0
    %v1842 = vsel %vm1822, %v1818, 0
    %v1845 = vsel %vm1822, %v1819, 0
    %1847 = vmatpush.msra.mxu0 0.0
    %1848 = vmatpush.msra.mxu0 0.0
    %1849 = vmatpush.msra.mxu0 0.0
    %1850 = vmatpush.msra.mxu0 0.0
    %1851 = vmatpush.msra.mxu0 0.0
    %1852 = vmatpush.msra.mxu0 0.0
    %1853 = vmatpush.msra.mxu0 0.0
    %1854 = vmatpush.msra.mxu0 0.0
    %1855 = vmatpush.msra.mxu0 0.0
    %1856 = vmatpush.msra.mxu0 0.0
    %1857 = vmatpush.msra.mxu0 0.0
    %1858 = vmatpush.msra.mxu0 0.0
    %1859 = vmatpush.msra.mxu0 0.0
    %1860 = vmatpush.msra.mxu0 0.0
    %1861 = vmatpush.msra.mxu0 %v1821
    %1862 = vmatpush.msra.mxu0 %v1820
    %1863 = vmatmul.f32.gmra.mxu0 %v1824
    %v1864 = vpop.f32.mrf.mxu0
    %v1865 = vadd.f32 0.0, %v1864
    %1866 = vmatmul.f32.gmra.mxu0 %v1827
    %v1867 = vpop.f32.mrf.mxu0
    %v1868 = vadd.f32 0.0, %v1867
    %1869 = vmatmul.f32.gmra.mxu0 %v1830
    %v1870 = vpop.f32.mrf.mxu0
    %v1871 = vadd.f32 0.0, %v1870
    %1872 = vmatmul.f32.gmra.mxu0 %v1833
    %v1873 = vpop.f32.mrf.mxu0
    %v1874 = vadd.f32 0.0, %v1873
    %1875 = vmatmul.f32.gmra.mxu0 %v1836
    %v1876 = vpop.f32.mrf.mxu0
    %v1877 = vadd.f32 0.0, %v1876
    %1878 = vmatmul.f32.gmra.mxu0 %v1839
    %v1879 = vpop.f32.mrf.mxu0
    %v1880 = vadd.f32 0.0, %v1879
    %1881 = vmatmul.f32.gmra.mxu0 %v1842
    %v1882 = vpop.f32.mrf.mxu0
    %v1883 = vadd.f32 0.0, %v1882
    %1884 = vmatmul.f32.gmra.mxu0 %v1845
    %v1885 = vpop.f32.mrf.mxu0
    %v1886 = vadd.f32 0.0, %v1885
    %1887 = vdwg.mxu0
    %v1888 = vld [vmem:[%s5] sm:$0x1]
    %v1890 = vperm.slane %v1888, 0
    %1892 = vmatpush.msra.mxu0 0.0
    %1893 = vmatpush.msra.mxu0 0.0
    %1894 = vmatpush.msra.mxu0 0.0
    %1895 = vmatpush.msra.mxu0 0.0
    %1896 = vmatpush.msra.mxu0 0.0
    %1897 = vmatpush.msra.mxu0 0.0
    %1898 = vmatpush.msra.mxu0 0.0
    %1899 = vmatpush.msra.mxu0 0.0
    %1900 = vmatpush.msra.mxu0 %v1886
    %1901 = vmatpush.msra.mxu0 %v1883
    %1902 = vmatpush.msra.mxu0 %v1880
    %1903 = vmatpush.msra.mxu0 %v1877
    %1904 = vmatpush.msra.mxu0 %v1874
    %1905 = vmatpush.msra.mxu0 %v1871
    %1906 = vmatpush.msra.mxu0 %v1868
    %1907 = vmatpush.msra.mxu0 %v1865
    %1908 = vmatmul.f32.gmra.mxu0 %v1748
    %v1909 = vpop.f32.mrf.mxu0
    %v1910 = vadd.f32 %v1890, %v1909
    %1911 = vmatmul.f32.gmra.mxu0 %v1751
    %v1912 = vpop.f32.mrf.mxu0
    %v1913 = vadd.f32 %v1890, %v1912
    %1914 = vmatmul.f32.gmra.mxu0 %v1754
    %v1915 = vpop.f32.mrf.mxu0
    %v1916 = vadd.f32 %v1890, %v1915
    %1917 = vmatmul.f32.gmra.mxu0 %v1757
    %v1918 = vpop.f32.mrf.mxu0
    %v1919 = vadd.f32 %v1890, %v1918
    %1920 = vmatmul.f32.gmra.mxu0 %v1760
    %v1921 = vpop.f32.mrf.mxu0
    %v1922 = vadd.f32 %v1890, %v1921
    %1923 = vmatmul.f32.gmra.mxu0 %v1763
    %v1924 = vpop.f32.mrf.mxu0
    %v1925 = vadd.f32 %v1890, %v1924
    %1926 = vmatmul.f32.gmra.mxu0 %v1766
    %v1927 = vpop.f32.mrf.mxu0
    %v1928 = vadd.f32 %v1890, %v1927
    %1929 = vmatmul.f32.gmra.mxu0 %v1769
    %v1930 = vpop.f32.mrf.mxu0
    %v1931 = vadd.f32 %v1890, %v1930
    %1932 = vdwg.mxu0
    %vm1933 = vcmask 48128
    %v1934 = vsel %vm1933, %v1910, -inf
    %1935 = vmax.xlane.f32.xlu0 %v1934
    %v1936 = vpop.xlane.xlu0 %1935
    %v1937 = vsel %vm1933, %v1913, -inf
    %1938 = vmax.xlane.f32.xlu0 %v1937
    %v1939 = vpop.xlane.xlu0 %1938
    %v1940 = vsel %vm1933, %v1916, -inf
    %1941 = vmax.xlane.f32.xlu0 %v1940
    %v1942 = vpop.xlane.xlu0 %1941
    %v1943 = vsel %vm1933, %v1919, -inf
    %1944 = vmax.xlane.f32.xlu0 %v1943
    %v1945 = vpop.xlane.xlu0 %1944
    %v1946 = vsel %vm1933, %v1922, -inf
    %1947 = vmax.xlane.f32.xlu0 %v1946
    %v1948 = vpop.xlane.xlu0 %1947
    %v1949 = vsel %vm1933, %v1925, -inf
    %1950 = vmax.xlane.f32.xlu0 %v1949
    %v1951 = vpop.xlane.xlu0 %1950
    %v1952 = vsel %vm1933, %v1928, -inf
    %1953 = vmax.xlane.f32.xlu0 %v1952
    %v1954 = vpop.xlane.xlu0 %1953
    %v1955 = vsel %vm1933, %v1931, -inf
    %1956 = vmax.xlane.f32.xlu0 %v1955
    %v1957 = vpop.xlane.xlu0 %1956
    %v1958 = vsub.f32 %v1910, %v1936
    %v1959 = vsub.f32 %v1913, %v1939
    %v1960 = vsub.f32 %v1916, %v1942
    %v1961 = vsub.f32 %v1919, %v1945
    %v1962 = vsub.f32 %v1922, %v1948
    %v1963 = vsub.f32 %v1925, %v1951
    %v1964 = vsub.f32 %v1928, %v1954
    %v1965 = vsub.f32 %v1931, %v1957
    %v1966 = vmul.f32 %v1958, 1.442695
    %v1967 = vpow.pop %v1966
    %v1968 = vmul.f32 %v1959, 1.442695
    %v1969 = vpow.pop %v1968
    %v1970 = vmul.f32 %v1960, 1.442695
    %v1971 = vpow.pop %v1970
    %v1972 = vmul.f32 %v1961, 1.442695
    %v1973 = vpow.pop %v1972
    %v1974 = vmul.f32 %v1962, 1.442695
    %v1975 = vpow.pop %v1974
    %v1976 = vmul.f32 %v1963, 1.442695
    %v1977 = vpow.pop %v1976
    %v1978 = vmul.f32 %v1964, 1.442695
    %v1979 = vpow.pop %v1978
    %v1980 = vmul.f32 %v1965, 1.442695
    %v1981 = vpow.pop %v1980
    %v1982 = vsel %vm1933, %v1967, 0.0
    %1983 = vadd.xlane.f32.xlu0 %v1982
    %v1984 = vpop.xlane.xlu0 %1983
    %v1985 = vsel %vm1933, %v1969, 0.0
    %1986 = vadd.xlane.f32.xlu0 %v1985
    %v1987 = vpop.xlane.xlu0 %1986
    %v1988 = vsel %vm1933, %v1971, 0.0
    %1989 = vadd.xlane.f32.xlu0 %v1988
    %v1990 = vpop.xlane.xlu0 %1989
    %v1991 = vsel %vm1933, %v1973, 0.0
    %1992 = vadd.xlane.f32.xlu0 %v1991
    %v1993 = vpop.xlane.xlu0 %1992
    %v1994 = vsel %vm1933, %v1975, 0.0
    %1995 = vadd.xlane.f32.xlu0 %v1994
    %v1996 = vpop.xlane.xlu0 %1995
    %v1997 = vsel %vm1933, %v1977, 0.0
    %1998 = vadd.xlane.f32.xlu0 %v1997
    %v1999 = vpop.xlane.xlu0 %1998
    %v2000 = vsel %vm1933, %v1979, 0.0
    %2001 = vadd.xlane.f32.xlu0 %v2000
    %v2002 = vpop.xlane.xlu0 %2001
    %v2003 = vsel %vm1933, %v1981, 0.0
    %2004 = vadd.xlane.f32.xlu0 %v2003
    %v2005 = vpop.xlane.xlu0 %2004
    %v2006 = vlog2.pop %v1984
    %v2007 = vmul.f32 %v2006, 0.6931472
    %v2008 = vlog2.pop %v1987
    %v2009 = vmul.f32 %v2008, 0.6931472
    %v2010 = vlog2.pop %v1990
    %v2011 = vmul.f32 %v2010, 0.6931472
    %v2012 = vlog2.pop %v1993
    %v2013 = vmul.f32 %v2012, 0.6931472
    %v2014 = vlog2.pop %v1996
    %v2015 = vmul.f32 %v2014, 0.6931472
    %v2016 = vlog2.pop %v1999
    %v2017 = vmul.f32 %v2016, 0.6931472
    %v2018 = vlog2.pop %v2002
    %v2019 = vmul.f32 %v2018, 0.6931472
    %v2020 = vlog2.pop %v2005
    %v2021 = vmul.f32 %v2020, 0.6931472
    %v2022 = vsub.f32 %v1958, %v2007
    %v2023 = vsub.f32 %v1959, %v2009
    %v2024 = vsub.f32 %v1960, %v2011
    %v2025 = vsub.f32 %v1961, %v2013
    %v2026 = vsub.f32 %v1962, %v2015
    %v2027 = vsub.f32 %v1963, %v2017
    %v2028 = vsub.f32 %v1964, %v2019
    %v2029 = vsub.f32 %v1965, %v2021
    %2030 = vst.msk [vmem:[%s6] sm:$0xff] %vm1933, %v2022
    %2031 = vst.msk [vmem:[%s6 + $0x8] sm:$0xff] %vm1933, %v2023
    %2032 = vst.msk [vmem:[%s6 + $0x10] sm:$0xff] %vm1933, %v2024
    %2033 = vst.msk [vmem:[%s6 + $0x18] sm:$0xff] %vm1933, %v2025
    %2034 = vst.msk [vmem:[%s6 + $0x20] sm:$0xff] %vm1933, %v2026
    %2035 = vst.msk [vmem:[%s6 + $0x28] sm:$0xff] %vm1933, %v2027
    %2036 = vst.msk [vmem:[%s6 + $0x30] sm:$0xff] %vm1933, %v2028
    %2037 = vst.msk [vmem:[%s6 + $0x38] sm:$0xff] %vm1933, %v2029
    // Predicated region
    $region38: #{tpu_custom_call.1} parent=1 // pred_check
      _
    $region39: #{tpu_custom_call.1} parent=1 // pred_check_branch
      %2039 = sbr.rel (0) target = $region41
    $region40: #{tpu_custom_call.1} parent=1 // pred_region
      _
    $region41: #{tpu_custom_call.1} parent=1 // pred_fallthru
      _
    // Predicated region
    $region42: #{tpu_custom_call.1} parent=1 // pred_check
      _
    $region43: #{tpu_custom_call.1} parent=1 // pred_check_branch
      %2041 = sbr.rel (0) target = $region45
    $region44: #{tpu_custom_call.1} parent=1 // pred_region
      _
    $region45: #{tpu_custom_call.1} parent=1 // pred_fallthru
      _
    %2042 = vsyncpa [#allocation3], 1
    %2043 = vsyncpa [#allocation5], 1

</llo_original>
